<compile_context>
chip_gen: v7x
topology: tpu7x:2x2x1
jax: 0.10.0
libtpu: 0.0.40
codegen_flags: <defaults>
</compile_context>

<pallas_src>
import functools

import jax
import jax.numpy as jnp
from jax.experimental import pallas as pl
from jax.experimental.pallas import tpu as pltpu

BN_EPS = 1e-5
ACT_DTYPE = jnp.bfloat16


# ----------------------------- in-kernel helpers ---------------------------- #

def _tap(x_ref, kh, kw, ho, wo, stride):
    """(kh, kw) conv tap of shape (ho, wo, Cin).

    stride == 1: x_ref is (1, H+2, W+2, Cin)  (padded NHWC tile).
    stride == 2: x_ref is (1, 4, (H+2)//2, (W+2)//2, Cin) — the padded input
      parity-decomposed over (row%2, col%2), so strided taps are contiguous.
    """
    if stride == 1:
        return x_ref[0, pl.ds(kh, ho), pl.ds(kw, wo), :]
    p = (kh % 2) * 2 + (kw % 2)
    return x_ref[0, p, pl.ds(kh // 2, ho), pl.ds(kw // 2, wo), :]


def _conv3x3(x_ref, w_ref, ho, wo, stride):
    """3x3 conv as one im2col matmul (contraction depth 9*Cin), f32 result."""
    cin = x_ref.shape[-1]
    cols = [_tap(x_ref, kh, kw, ho, wo, stride).reshape(ho * wo, cin)
            for kh in range(3) for kw in range(3)]
    patches = jnp.concatenate(cols, axis=-1)                 # (ho*wo, 9*cin) bf16
    return jnp.dot(patches, w_ref[...], preferred_element_type=jnp.float32)


# ------------------------------- Pallas kernels ----------------------------- #

def _stem_kernel(p_ref, w_ref, s_ref, b_ref, o_ref, *, ho, wo):
    """Stem conv (3x3, Cin=3) as a K=27 im2col matmul + folded BN + ReLU."""
    acc = jnp.dot(p_ref[0], w_ref[...], preferred_element_type=jnp.float32)
    out = jnp.maximum(acc * s_ref[...] + b_ref[...], 0.0)
    o_ref[0] = out.reshape(ho, wo, -1).astype(o_ref.dtype)


def _block_kernel(x_ref, w1_ref, s1_ref, b1_ref, w2_ref, s2_ref, b2_ref,
                  *args, stride, ho, wo, proj):
    """Fused BasicBlock: conv1+BN+ReLU -> conv2+BN -> (+shortcut) -> ReLU."""
    if proj:
        wsc_ref, ssc_ref, bsc_ref, o_ref, mid_ref = args
    else:
        o_ref, mid_ref = args
    planes = w1_ref.shape[-1]

    # conv1 (3x3, stride) + BN + ReLU  -> zero-padded VMEM scratch.
    mid = _conv3x3(x_ref, w1_ref, ho, wo, stride)
    mid = jnp.maximum(mid * s1_ref[...] + b1_ref[...], 0.0)
    mid_ref[...] = jnp.zeros_like(mid_ref)                  # zero the conv2 halo
    mid_ref[0, 1:ho + 1, 1:wo + 1, :] = (
        mid.reshape(ho, wo, planes).astype(mid_ref.dtype))

    # conv2 (3x3, stride 1) + BN.
    out = _conv3x3(mid_ref, w2_ref, ho, wo, 1)
    out = out * s2_ref[...] + b2_ref[...]

    # Shortcut (1x1 projection conv + BN or identity), fused add + ReLU.
    if proj:
        sc = jnp.dot(_tap(x_ref, 1, 1, ho, wo, stride).reshape(ho * wo, -1),
                     wsc_ref[...], preferred_element_type=jnp.float32)
        sc = sc * ssc_ref[...] + bsc_ref[...]
    else:
        sc = _tap(x_ref, 1, 1, ho, wo, 1).reshape(ho * wo, planes).astype(jnp.float32)
    out = jnp.maximum(out + sc, 0.0)
    o_ref[0] = out.reshape(ho, wo, planes).astype(o_ref.dtype)


def _head_kernel(x_ref, w_ref, b_ref, o_ref):
    """avg_pool2d(4) + Linear + log_softmax.  x_ref: (N, 16, 512)."""
    pooled = jnp.mean(x_ref[...].astype(jnp.float32), axis=1)          # (N, 512)
    logits = jnp.dot(pooled, w_ref[...],
                     preferred_element_type=jnp.float32) + b_ref[...]
    m = jnp.max(logits, axis=-1, keepdims=True)
    lse = jnp.log(jnp.sum(jnp.exp(logits - m), axis=-1, keepdims=True)) + m
    o_ref[...] = logits - lse                                          # log_softmax


# -------------------------------- JAX wrappers ------------------------------ #

def stem(x, w, scale, shift):
    """x: (N, H, W, 3) bf16, w: (27, 64) bf16.  Wrapper-side im2col (tiny)."""
    n, h, wd, cin = x.shape
    cout = w.shape[-1]
    xp = jnp.pad(x, ((0, 0), (1, 1), (1, 1), (0, 0)))
    cols = [xp[:, kh:kh + h, kw:kw + wd, :] for kh in range(3) for kw in range(3)]
    patches = jnp.concatenate(cols, axis=-1).reshape(n, h * wd, 9 * cin)
    kern = functools.partial(_stem_kernel, ho=h, wo=wd)
    return pl.pallas_call(
        kern,
        out_shape=jax.ShapeDtypeStruct((n, h, wd, cout), ACT_DTYPE),
        grid=(n,),
        in_specs=[
            pl.BlockSpec((1, h * wd, 9 * cin), lambda i: (i, 0, 0)),
            pl.BlockSpec((9 * cin, cout), lambda i: (0, 0)),
            pl.BlockSpec((1, cout), lambda i: (0, 0)),
            pl.BlockSpec((1, cout), lambda i: (0, 0)),
        ],
        out_specs=pl.BlockSpec((1, h, wd, cout), lambda i: (i, 0, 0, 0)),
        compiler_params=pltpu.CompilerParams(dimension_semantics=("parallel",)),
    )(patches, w, scale, shift)


def basic_block(x, blk):
    """Fused BasicBlock.  x: (N, H, W, Cin) bf16 NHWC."""
    n, h, w, cin = x.shape
    stride = blk["stride"]
    planes = blk["w1"].shape[-1]
    ho, wo = h // stride, w // stride
    proj = "wsc" in blk

    xp = jnp.pad(x, ((0, 0), (1, 1), (1, 1), (0, 0)))
    hp, wp = h + 2, w + 2
    if stride == 1:
        x_in = xp
        x_spec = pl.BlockSpec((1, hp, wp, cin), lambda i: (i, 0, 0, 0))
    else:
        # Parity decomposition so stride-2 taps are contiguous in-kernel.
        x_in = (xp.reshape(n, hp // 2, 2, wp // 2, 2, cin)
                  .transpose(0, 2, 4, 1, 3, 5)
                  .reshape(n, 4, hp // 2, wp // 2, cin))
        x_spec = pl.BlockSpec((1, 4, hp // 2, wp // 2, cin),
                              lambda i: (i, 0, 0, 0, 0))

    def w_spec(rows):
        return pl.BlockSpec((rows, planes), lambda i: (0, 0))
    v_spec = pl.BlockSpec((1, planes), lambda i: (0, 0))

    inputs = [x_in, blk["w1"], blk["s1"], blk["b1"], blk["w2"], blk["s2"], blk["b2"]]
    in_specs = [x_spec, w_spec(9 * cin), v_spec, v_spec,
                w_spec(9 * planes), v_spec, v_spec]
    if proj:
        inputs += [blk["wsc"], blk["ssc"], blk["bsc"]]
        in_specs += [w_spec(cin), v_spec, v_spec]

    kern = functools.partial(_block_kernel, stride=stride, ho=ho, wo=wo, proj=proj)
    return pl.pallas_call(
        kern,
        out_shape=jax.ShapeDtypeStruct((n, ho, wo, planes), ACT_DTYPE),
        grid=(n,),
        in_specs=in_specs,
        out_specs=pl.BlockSpec((1, ho, wo, planes), lambda i: (i, 0, 0, 0)),
        scratch_shapes=[pltpu.VMEM((1, ho + 2, wo + 2, planes), ACT_DTYPE)],
        compiler_params=pltpu.CompilerParams(
            dimension_semantics=("parallel",),
            vmem_limit_bytes=32 * 1024 * 1024),
    )(*inputs)


def head(x, w, b):
    n = x.shape[0]
    ncls = w.shape[-1]
    return pl.pallas_call(
        _head_kernel,
        out_shape=jax.ShapeDtypeStruct((n, ncls), jnp.float32),
    )(x, w, b)


# --------------------------- parameter construction ------------------------- #

def _fold_bn(key, c):
    k1, k2, k3, k4 = jax.random.split(key, 4)
    gamma = 1.0 + 0.1 * jax.random.normal(k1, (c,), jnp.float32)
    beta = 0.1 * jax.random.normal(k2, (c,), jnp.float32)
    mean = 0.1 * jax.random.normal(k3, (c,), jnp.float32)
    var = 1.0 + 0.1 * jnp.abs(jax.random.normal(k4, (c,), jnp.float32))
    scale = gamma / jnp.sqrt(var + BN_EPS)
    shift = beta - mean * scale
    return scale.reshape(1, c), shift.reshape(1, c)


def _conv_w(key, k, cin, cout):
    std = (2.0 / (k * k * cin)) ** 0.5
    w = std * jax.random.normal(key, (k, k, cin, cout), jnp.float32)
    return w.reshape(k * k * cin, cout).astype(ACT_DTYPE)    # im2col weight layout


def make_resnet_params(key, num_blocks=(1, 1, 1, 1), num_classes=10):
    keys = iter(jax.random.split(key, 256))
    s, b = _fold_bn(next(keys), 64)
    params = {"stem_w": _conv_w(next(keys), 3, 3, 64), "stem_s": s, "stem_b": b}
    in_planes = 64
    layers = []
    for planes, nb, stride in zip((64, 128, 256, 512), num_blocks, (1, 2, 2, 2)):
        strides = [stride] + [1] * (nb - 1)
        blocks = []
        for st in strides:
            s1, b1 = _fold_bn(next(keys), planes)
            s2, b2 = _fold_bn(next(keys), planes)
            blk = {"w1": _conv_w(next(keys), 3, in_planes, planes), "s1": s1, "b1": b1,
                   "w2": _conv_w(next(keys), 3, planes, planes), "s2": s2, "b2": b2,
                   "stride": st}
            if st != 1 or in_planes != planes:   # BasicBlock projection shortcut
                ssc, bsc = _fold_bn(next(keys), planes)
                blk["wsc"] = _conv_w(next(keys), 1, in_planes, planes)
                blk["ssc"] = ssc
                blk["bsc"] = bsc
            blocks.append(blk)
            in_planes = planes
        layers.append(blocks)
    params["layers"] = layers
    kw, kb = jax.random.split(next(keys))
    params["lin_w"] = (1.0 / 512 ** 0.5) * jax.random.normal(
        kw, (512, num_classes), jnp.float32)
    params["lin_b"] = 0.01 * jax.random.normal(kb, (1, num_classes), jnp.float32)
    return params


# ------------------------------- forward pass ------------------------------- #

def resnet_forward(params, x_nchw):
    # PyTorch-style NCHW input -> NHWC bf16 for the kernels.
    x = jnp.transpose(x_nchw, (0, 2, 3, 1)).astype(ACT_DTYPE)
    out = stem(x, params["stem_w"], params["stem_s"], params["stem_b"])
    for blocks in params["layers"]:
        for blk in blocks:
            out = basic_block(out, blk)
    n, h, w, c = out.shape                        # (N, 4, 4, 512)
    out = out.reshape(n, h * w, c)                # flatten spatial for fused head
    return head(out, params["lin_w"], params["lin_b"])


if __name__ == "__main__":
    key = jax.random.PRNGKey(0)
    kp, kx = jax.random.split(key)
    params = make_resnet_params(kp, num_blocks=(1, 1, 1, 1), num_classes=10)
    x = jax.random.normal(kx, (2, 3, 32, 32), jnp.float32)   # NCHW, CIFAR-sized
    out = resnet_forward(params, x)
    out = jax.block_until_ready(out)
    assert out.shape == (2, 10)
    assert jnp.all(jnp.isfinite(out))
    print("KERNEL_OK")
</pallas_src>

<mosaic_0001>
module attributes {stable_mosaic.version = 11 : i64} {
  func.func @_stem_kernel(%arg0: i32, %arg1: memref<1x1024x27xbf16, #tpu.memory_space<vmem>>, %arg2: memref<27x64xbf16, #tpu.memory_space<vmem>>, %arg3: memref<1x64xf32, #tpu.memory_space<vmem>>, %arg4: memref<1x64xf32, #tpu.memory_space<vmem>>, %arg5: memref<1x32x32x64xbf16, #tpu.memory_space<vmem>>) attributes {dimension_semantics = [#tpu.dimension_semantics<parallel>], iteration_bounds = array<i64: 2>, scalar_prefetch = 0 : i64, scratch_operands = 0 : i64, tpu.core_type = #tpu.core_type<tc>, window_params = [{transform_indices = @transform_0, window_bounds = array<i64: 1, 1024, 27>}, {pipeline_mode = #tpu.pipeline_mode<synchronous>, transform_indices = @transform_1, window_bounds = array<i64: 27, 64>}, {pipeline_mode = #tpu.pipeline_mode<synchronous>, transform_indices = @transform_2, window_bounds = array<i64: 1, 64>}, {pipeline_mode = #tpu.pipeline_mode<synchronous>, transform_indices = @transform_3, window_bounds = array<i64: 1, 64>}, {transform_indices = @transform_4, window_bounds = array<i64: 1, 32, 32, 64>}]} {
    %c0 = arith.constant 0 : index
    %c0_0 = arith.constant 0 : index
    %c0_1 = arith.constant 0 : index
    %0 = vector.load %arg1[%c0, %c0_0, %c0_1] : memref<1x1024x27xbf16, #tpu.memory_space<vmem>>, vector<1x1024x27xbf16>
    %1 = vector.shape_cast %0 : vector<1x1024x27xbf16> to vector<1024x27xbf16>
    %c0_2 = arith.constant 0 : index
    %c0_3 = arith.constant 0 : index
    %2 = vector.load %arg2[%c0_2, %c0_3] : memref<27x64xbf16, #tpu.memory_space<vmem>>, vector<27x64xbf16>
    %cst = arith.constant dense<0.000000e+00> : vector<1024x64xf32>
    %3 = tpu.matmul %1, %2, %cst {dimension_numbers = #tpu.dot_dimension_numbers<[1], [0], [0], [1], [0, 0, 1, 1], [], []>} : vector<1024x27xbf16>, vector<27x64xbf16>, vector<1024x64xf32> -> vector<1024x64xf32>
    %c0_4 = arith.constant 0 : index
    %c0_5 = arith.constant 0 : index
    %4 = vector.load %arg3[%c0_4, %c0_5] : memref<1x64xf32, #tpu.memory_space<vmem>>, vector<1x64xf32>
    %5 = vector.broadcast %4 : vector<1x64xf32> to vector<1024x64xf32>
    %6 = arith.mulf %3, %5 : vector<1024x64xf32>
    %c0_6 = arith.constant 0 : index
    %c0_7 = arith.constant 0 : index
    %7 = vector.load %arg4[%c0_6, %c0_7] : memref<1x64xf32, #tpu.memory_space<vmem>>, vector<1x64xf32>
    %8 = vector.broadcast %7 : vector<1x64xf32> to vector<1024x64xf32>
    %9 = arith.addf %6, %8 : vector<1024x64xf32>
    %cst_8 = arith.constant 0.000000e+00 : f32
    %10 = vector.broadcast %cst_8 : f32 to vector<1024x64xf32>
    %11 = arith.maximumf %9, %10 : vector<1024x64xf32>
    %12 = vector.shape_cast %11 : vector<1024x64xf32> to vector<32x32x64xf32>
    %13 = arith.truncf %12 : vector<32x32x64xf32> to vector<32x32x64xbf16>
    %c0_9 = arith.constant 0 : index
    %c0_10 = arith.constant 0 : index
    %c0_11 = arith.constant 0 : index
    %c0_12 = arith.constant 0 : index
    %14 = vector.load %arg5[%c0_9, %c0_10, %c0_11, %c0_12] : memref<1x32x32x64xbf16, #tpu.memory_space<vmem>>, vector<1x32x32x64xbf16>
    %15 = vector.shape_cast %14 : vector<1x32x32x64xbf16> to vector<32x32x64xbf16>
    %16 = vector.shape_cast %13 : vector<32x32x64xbf16> to vector<1x32x32x64xbf16>
    tpu.vector_store %arg5[%c0_9, %c0_10, %c0_11, %c0_12], %16 {strides = array<i32>} : memref<1x32x32x64xbf16, #tpu.memory_space<vmem>>, vector<1x32x32x64xbf16>,
    return
  }
  func.func @transform_0(%arg0: i32) -> (i32, i32, i32) {
    %c0_i32 = arith.constant 0 : i32
    %c0_i32_0 = arith.constant 0 : i32
    %c0_i32_1 = arith.constant 0 : i32
    return %arg0, %c0_i32, %c0_i32_0 : i32, i32, i32
  }
  func.func @transform_1(%arg0: i32) -> (i32, i32) {
    %c0_i32 = arith.constant 0 : i32
    %c0_i32_0 = arith.constant 0 : i32
    %c0_i32_1 = arith.constant 0 : i32
    return %c0_i32, %c0_i32_0 : i32, i32
  }
  func.func @transform_2(%arg0: i32) -> (i32, i32) {
    %c0_i32 = arith.constant 0 : i32
    %c0_i32_0 = arith.constant 0 : i32
    %c0_i32_1 = arith.constant 0 : i32
    return %c0_i32, %c0_i32_0 : i32, i32
  }
  func.func @transform_3(%arg0: i32) -> (i32, i32) {
    %c0_i32 = arith.constant 0 : i32
    %c0_i32_0 = arith.constant 0 : i32
    %c0_i32_1 = arith.constant 0 : i32
    return %c0_i32, %c0_i32_0 : i32, i32
  }
  func.func @transform_4(%arg0: i32) -> (i32, i32, i32, i32) {
    %c0_i32 = arith.constant 0 : i32
    %c0_i32_0 = arith.constant 0 : i32
    %c0_i32_1 = arith.constant 0 : i32
    %c0_i32_2 = arith.constant 0 : i32
    return %arg0, %c0_i32, %c0_i32_0, %c0_i32_1 : i32, i32, i32, i32
  }
}

</mosaic_0001>

<llo_original>
// kernel: tpu_custom_call.1
$region0: #{tpu_custom_call.1}
  #allocation0 [shape = 'u32[]', space=smem, size = 0x4, offset = 0x4, fixed_abs, tag = 'smem constant byte address 0x4 - core index']
  #allocation1 [shape = 'u32[144,128]{1,0:T(1,128)}', space=vmem, size = 0x12000, scoped, tag = 'internal scratch']
  %s0 = inlined_call_operand.vmem [shape: bf16[2,1024,27], index: 0, kind: input, shape index: {}]
  %s1 = inlined_call_operand.vmem [shape: bf16[27,64], index: 1, kind: input, shape index: {}]
  %s2 = inlined_call_operand.vmem [shape: f32[1,64], index: 2, kind: input, shape index: {}]
  %s3 = inlined_call_operand.vmem [shape: f32[1,64], index: 3, kind: input, shape index: {}]
  %s4 = inlined_call_operand.hbm [shape: bf16[2,32,32,64], index: 4, kind: output, shape index: {}]
  %s5 = sld [smem:[#allocation0]]
  $region49: #{tpu_custom_call.1} parent=0
    _
  %s7 = ssub.s32 1, %s5
  %s8 = scalar_select 0, %s7, %s5
  $region1: #{tpu_custom_call.1} parent=0
    #allocation2 [shape = 'u8[524288]{0}', space=vmem, size = 0x80000, scoped, tag = 'output window, operand 0']
    #allocation3 [shape = 's32[2]{0}', space=sflag, size = 0x8, scoped, tag = 'scoped memory for tpu_custom_call.1']
    %9 = vsyncpa [#allocation3], 0
    %s10 = scalar_lea.sflag [#allocation3], 1
    %11 = vsyncpa %s10, 0
    loop: start=0, step=1, limit=4
    $region2: #{tpu_custom_call.1} parent=1 // loop_pre_header
      _
    $region3: #{tpu_custom_call.1} parent=1 // loop_header
      %s13 = sphi 0, %s17
      %p14 = scmp.ge.s32.totalorder %s13, 4
      %s23 = sphi 0, %s25
      %s26 = sphi 0, %s23
      %s27 = sphi 0, %s26
      %s43 = sphi 0, %s27
      %s47 = sphi 0, %s47
      %s49 = sphi 0, %s47
      %s50 = sphi 0, %s49
      %s64 = sphi 0, %s50
      %s68 = sphi 0, %s68
      %s70 = sphi 0, %s68
      %s71 = sphi 0, %s70
      %s85 = sphi 0, %s71
      %s89 = sphi 0, %s89
      %s91 = sphi 0, %s89
      %s92 = sphi 0, %s91
      %s106 = sphi 0, %s92
      %s112 = sphi 0, %s114
      %s115 = sphi 0, %s112
      %s116 = sphi 0, %s115
      %s132 = sphi 0, %s116
    $region4: #{tpu_custom_call.1} parent=1 // loop_header_branch
      %16 = sbr.rel (%p14) target = $region8
    $region5: #{tpu_custom_call.1} parent=1 // loop_body
      %s18 = ssub.s32 %s13, 1
      %s19 = ssub.s32 %s13, 2
      %s20 = sadd.s32 %s13, 1
      %s21 = ssub.s32 %s13, %s20
      %p22 = scmp.eq.s32.totalorder %s21, 0
      %s24 = sadd.s32 %s23, 1
      %s25 = scalar_select %p22, %s23, %s24
      %p28 = pneg %p22
      %p29 = scmp.eq.s32.totalorder %s13, 1
      %p30 = por %p28, %p29
      %p31 = scmp.ne.s32.totalorder %s23, %s26
      %p32 = scmp.eq.s32.totalorder %s13, 0
      %p33 = por %p31, %p32
      %p34 = scmp.ne.s32.totalorder %s23, %s26
      %p35 = scmp.eq.s32.totalorder %s18, 1
      %p36 = por %p34, %p35
      %p37 = scmp.ne.s32.totalorder %s26, %s27
      %p38 = scmp.eq.s32.totalorder %s18, 0
      %p39 = por %p37, %p38
      %p40 = scmp.ne.s32.totalorder %s26, %s27
      %p41 = scmp.eq.s32.totalorder %s19, 1
      %p42 = por %p40, %p41
      %p44 = scmp.ne.s32.totalorder %s27, %s43
      %p45 = scmp.eq.s32.totalorder %s19, 0
      %p46 = por %p44, %p45
      %s48 = sadd.s32 %s47, 1
      %p51 = scmp.eq.s32.totalorder %s13, 1
      %p52 = scmp.ne.s32.totalorder %s47, %s49
      %p53 = scmp.eq.s32.totalorder %s13, 0
      %p54 = por %p52, %p53
      %p55 = scmp.ne.s32.totalorder %s47, %s49
      %p56 = scmp.eq.s32.totalorder %s18, 1
      %p57 = por %p55, %p56
      %p58 = scmp.ne.s32.totalorder %s49, %s50
      %p59 = scmp.eq.s32.totalorder %s18, 0
      %p60 = por %p58, %p59
      %p61 = scmp.ne.s32.totalorder %s49, %s50
      %p62 = scmp.eq.s32.totalorder %s19, 1
      %p63 = por %p61, %p62
      %p65 = scmp.ne.s32.totalorder %s50, %s64
      %p66 = scmp.eq.s32.totalorder %s19, 0
      %p67 = por %p65, %p66
      %s69 = sadd.s32 %s68, 1
      %p72 = scmp.eq.s32.totalorder %s13, 1
      %p73 = scmp.ne.s32.totalorder %s68, %s70
      %p74 = scmp.eq.s32.totalorder %s13, 0
      %p75 = por %p73, %p74
      %p76 = scmp.ne.s32.totalorder %s68, %s70
      %p77 = scmp.eq.s32.totalorder %s18, 1
      %p78 = por %p76, %p77
      %p79 = scmp.ne.s32.totalorder %s70, %s71
      %p80 = scmp.eq.s32.totalorder %s18, 0
      %p81 = por %p79, %p80
      %p82 = scmp.ne.s32.totalorder %s70, %s71
      %p83 = scmp.eq.s32.totalorder %s19, 1
      %p84 = por %p82, %p83
      %p86 = scmp.ne.s32.totalorder %s71, %s85
      %p87 = scmp.eq.s32.totalorder %s19, 0
      %p88 = por %p86, %p87
      %s90 = sadd.s32 %s89, 1
      %p93 = scmp.eq.s32.totalorder %s13, 1
      %p94 = scmp.ne.s32.totalorder %s89, %s91
      %p95 = scmp.eq.s32.totalorder %s13, 0
      %p96 = por %p94, %p95
      %p97 = scmp.ne.s32.totalorder %s89, %s91
      %p98 = scmp.eq.s32.totalorder %s18, 1
      %p99 = por %p97, %p98
      %p100 = scmp.ne.s32.totalorder %s91, %s92
      %p101 = scmp.eq.s32.totalorder %s18, 0
      %p102 = por %p100, %p101
      %p103 = scmp.ne.s32.totalorder %s91, %s92
      %p104 = scmp.eq.s32.totalorder %s19, 1
      %p105 = por %p103, %p104
      %p107 = scmp.ne.s32.totalorder %s92, %s106
      %p108 = scmp.eq.s32.totalorder %s19, 0
      %p109 = por %p107, %p108
      %s110 = ssub.s32 %s13, %s20
      %p111 = scmp.eq.s32.totalorder %s110, 0
      %s113 = sadd.s32 %s112, 1
      %s114 = scalar_select %p111, %s112, %s113
      %p117 = pneg %p111
      %p118 = scmp.eq.s32.totalorder %s13, 1
      %p119 = por %p117, %p118
      %p120 = scmp.ne.s32.totalorder %s112, %s115
      %p121 = scmp.eq.s32.totalorder %s13, 0
      %p122 = por %p120, %p121
      %p123 = scmp.ne.s32.totalorder %s112, %s115
      %p124 = scmp.eq.s32.totalorder %s18, 1
      %p125 = por %p123, %p124
      %p126 = scmp.ne.s32.totalorder %s115, %s116
      %p127 = scmp.eq.s32.totalorder %s18, 0
      %p128 = por %p126, %p127
      %p129 = scmp.ne.s32.totalorder %s115, %s116
      %p130 = scmp.eq.s32.totalorder %s19, 1
      %p131 = por %p129, %p130
      %p133 = scmp.ne.s32.totalorder %s116, %s132
      %p134 = scmp.eq.s32.totalorder %s19, 0
      %p135 = por %p133, %p134
      %p136 = scmp.le.s32.totalorder 1, %s13
      %p137 = scmp.lt.s32.totalorder %s13, 3
      %p138 = pnand %p136, %p137
      %p139 = pneg %p138
      // Predicated region
      $region9: #{tpu_custom_call.1} parent=5 // pred_check
        _
      $region10: #{tpu_custom_call.1} parent=5 // pred_check_branch
        %141 = sbr.rel (%p138) target = $region12
      $region11: #{tpu_custom_call.1} parent=5 // pred_region
        %s142 = ssub.s32 %s13, 1
        // Predicated region
        $region13: #{tpu_custom_call.1} parent=11 // pred_check
          %p143 = pneg %p60
        $region14: #{tpu_custom_call.1} parent=11 // pred_check_branch
          %145 = sbr.rel (%p143) target = $region16
        $region15: #{tpu_custom_call.1} parent=11 // pred_region
          _
        $region16: #{tpu_custom_call.1} parent=11 // pred_fallthru
          _
        // Predicated region
        $region17: #{tpu_custom_call.1} parent=11 // pred_check
          %p146 = pneg %p81
        $region18: #{tpu_custom_call.1} parent=11 // pred_check_branch
          %148 = sbr.rel (%p146) target = $region20
        $region19: #{tpu_custom_call.1} parent=11 // pred_region
          _
        $region20: #{tpu_custom_call.1} parent=11 // pred_fallthru
          _
        // Predicated region
        $region21: #{tpu_custom_call.1} parent=11 // pred_check
          %p149 = pneg %p102
        $region22: #{tpu_custom_call.1} parent=11 // pred_check_branch
          %151 = sbr.rel (%p149) target = $region24
        $region23: #{tpu_custom_call.1} parent=11 // pred_region
          _
        $region24: #{tpu_custom_call.1} parent=11 // pred_fallthru
          _
      $region12: #{tpu_custom_call.1} parent=5 // pred_fallthru
        _
      %p152 = scmp.lt.s32.totalorder %s13, 2
      // Predicated region
      $region25: #{tpu_custom_call.1} parent=5 // pred_check
        %p153 = pneg %p152
      $region26: #{tpu_custom_call.1} parent=5 // pred_check_branch
        %155 = sbr.rel (%p153) target = $region28
      $region27: #{tpu_custom_call.1} parent=5 // pred_region
        // Predicated region
        $region29: #{tpu_custom_call.1} parent=27 // pred_check
          %p156 = pneg %p33
        $region30: #{tpu_custom_call.1} parent=27 // pred_check_branch
          %158 = sbr.rel (%p156) target = $region32
        $region31: #{tpu_custom_call.1} parent=27 // pred_region
          %p159 = scmp.lt.s32.totalorder %s13, 1
          %s160 = scalar_select %p159, %s13, 1
          %s161 = smul.addr %s160, 128
          %s162 = smul.addr %s161, 4
          %s163 = scalar_lea.vmem %s0, %s162
        $region32: #{tpu_custom_call.1} parent=27 // pred_fallthru
          _
      $region28: #{tpu_custom_call.1} parent=5 // pred_fallthru
        _
      %p164 = scmp.le.s32.totalorder 1, %s13
      %p165 = scmp.lt.s32.totalorder %s13, 3
      %p166 = pnand %p164, %p165
      %p167 = pneg %p166
      // Predicated region
      $region33: #{tpu_custom_call.1} parent=5 // pred_check
        _
      $region34: #{tpu_custom_call.1} parent=5 // pred_check_branch
        %169 = sbr.rel (%p166) target = $region36
      $region35: #{tpu_custom_call.1} parent=5 // pred_region
        %s170 = ssub.s32 %s13, 1
        %p171 = scmp.lt.s32.totalorder %s18, 1
        %s172 = scalar_select %p171, %s18, 1
        %s173 = smul.addr %s172, 128
        %s174 = smul.addr %s173, 4
        %s175 = scalar_lea.vmem %s0, %s174
        %p176 = pneg %p39
        %p177 = pneg %p36
        %p178 = pneg %p60
        %p179 = pneg %p57
        %p180 = pneg %p81
        %p181 = pneg %p78
        %p182 = pneg %p102
        %p183 = pneg %p99
        %p184 = pneg %p128
        %p185 = pneg %p125
        %s186 = sand.u32 %s115, 1
        %s187 = scalar_lea.sflag [#allocation3], %s186
        %s188 = sand.u32 %s115, 1
        %s189 = smul.addr %s188, 512
        %s190 = scalar_lea.vmem [#allocation2], %s189
        %p191 = scmp.lt.s32.totalorder %s18, 1
        %s192 = scalar_select %p191, %s18, 1
        %s193 = smul.addr %s192, 128
        %s194 = smul.addr %s193, 4
        %s195 = scalar_lea.vmem %s0, %s194
        %v197 = vld [vmem:[%s195] sm:$0xf]
        %v198 = vld [vmem:[%s195 + $0x4] sm:$0xf]
        %v199 = vld [vmem:[%s195 + $0x8] sm:$0xf]
        %v200 = vld [vmem:[%s195 + $0xc] sm:$0xf]
        %v201 = vld [vmem:[%s195 + $0x10] sm:$0xf]
        %v202 = vld [vmem:[%s195 + $0x14] sm:$0xf]
        %v203 = vld [vmem:[%s195 + $0x18] sm:$0xf]
        %v204 = vld [vmem:[%s195 + $0x1c] sm:$0xf]
        %v205 = vld [vmem:[%s195 + $0x20] sm:$0xf]
        %v206 = vld [vmem:[%s195 + $0x24] sm:$0xf]
        %v207 = vld [vmem:[%s195 + $0x28] sm:$0xf]
        %v208 = vld [vmem:[%s195 + $0x2c] sm:$0xf]
        %v209 = vld [vmem:[%s195 + $0x30] sm:$0xf]
        %v210 = vld [vmem:[%s195 + $0x34] sm:$0xf]
        %v211 = vld [vmem:[%s195 + $0x38] sm:$0xf]
        %v212 = vld [vmem:[%s195 + $0x3c] sm:$0xf]
        %v213 = vld [vmem:[%s195 + $0x40] sm:$0xf]
        %v214 = vld [vmem:[%s195 + $0x44] sm:$0xf]
        %v215 = vld [vmem:[%s195 + $0x48] sm:$0xf]
        %v216 = vld [vmem:[%s195 + $0x4c] sm:$0xf]
        %v217 = vld [vmem:[%s195 + $0x50] sm:$0xf]
        %v218 = vld [vmem:[%s195 + $0x54] sm:$0xf]
        %v219 = vld [vmem:[%s195 + $0x58] sm:$0xf]
        %v220 = vld [vmem:[%s195 + $0x5c] sm:$0xf]
        %v221 = vld [vmem:[%s195 + $0x60] sm:$0xf]
        %v222 = vld [vmem:[%s195 + $0x64] sm:$0xf]
        %v223 = vld [vmem:[%s195 + $0x68] sm:$0xf]
        %v224 = vld [vmem:[%s195 + $0x6c] sm:$0xf]
        %v225 = vld [vmem:[%s195 + $0x70] sm:$0xf]
        %v226 = vld [vmem:[%s195 + $0x74] sm:$0xf]
        %v227 = vld [vmem:[%s195 + $0x78] sm:$0xf]
        %v228 = vld [vmem:[%s195 + $0x7c] sm:$0xf]
        %v229 = vld [vmem:[%s195 + $0x80] sm:$0xf]
        %v230 = vld [vmem:[%s195 + $0x84] sm:$0xf]
        %v231 = vld [vmem:[%s195 + $0x88] sm:$0xf]
        %v232 = vld [vmem:[%s195 + $0x8c] sm:$0xf]
        %v233 = vld [vmem:[%s195 + $0x90] sm:$0xf]
        %v234 = vld [vmem:[%s195 + $0x94] sm:$0xf]
        %v235 = vld [vmem:[%s195 + $0x98] sm:$0xf]
        %v236 = vld [vmem:[%s195 + $0x9c] sm:$0xf]
        %v237 = vld [vmem:[%s195 + $0xa0] sm:$0xf]
        %v238 = vld [vmem:[%s195 + $0xa4] sm:$0xf]
        %v239 = vld [vmem:[%s195 + $0xa8] sm:$0xf]
        %v240 = vld [vmem:[%s195 + $0xac] sm:$0xf]
        %v241 = vld [vmem:[%s195 + $0xb0] sm:$0xf]
        %v242 = vld [vmem:[%s195 + $0xb4] sm:$0xf]
        %v243 = vld [vmem:[%s195 + $0xb8] sm:$0xf]
        %v244 = vld [vmem:[%s195 + $0xbc] sm:$0xf]
        %v245 = vld [vmem:[%s195 + $0xc0] sm:$0xf]
        %v246 = vld [vmem:[%s195 + $0xc4] sm:$0xf]
        %v247 = vld [vmem:[%s195 + $0xc8] sm:$0xf]
        %v248 = vld [vmem:[%s195 + $0xcc] sm:$0xf]
        %v249 = vld [vmem:[%s195 + $0xd0] sm:$0xf]
        %v250 = vld [vmem:[%s195 + $0xd4] sm:$0xf]
        %v251 = vld [vmem:[%s195 + $0xd8] sm:$0xf]
        %v252 = vld [vmem:[%s195 + $0xdc] sm:$0xf]
        %v253 = vld [vmem:[%s195 + $0xe0] sm:$0xf]
        %v254 = vld [vmem:[%s195 + $0xe4] sm:$0xf]
        %v255 = vld [vmem:[%s195 + $0xe8] sm:$0xf]
        %v256 = vld [vmem:[%s195 + $0xec] sm:$0xf]
        %v257 = vld [vmem:[%s195 + $0xf0] sm:$0xf]
        %v258 = vld [vmem:[%s195 + $0xf4] sm:$0xf]
        %v259 = vld [vmem:[%s195 + $0xf8] sm:$0xf]
        %v260 = vld [vmem:[%s195 + $0xfc] sm:$0xf]
        %v261 = vld [vmem:[%s195 + $0x100] sm:$0xf]
        %v262 = vld [vmem:[%s195 + $0x104] sm:$0xf]
        %v263 = vld [vmem:[%s195 + $0x108] sm:$0xf]
        %v264 = vld [vmem:[%s195 + $0x10c] sm:$0xf]
        %v265 = vld [vmem:[%s195 + $0x110] sm:$0xf]
        %v266 = vld [vmem:[%s195 + $0x114] sm:$0xf]
        %v267 = vld [vmem:[%s195 + $0x118] sm:$0xf]
        %v268 = vld [vmem:[%s195 + $0x11c] sm:$0xf]
        %v269 = vld [vmem:[%s195 + $0x120] sm:$0xf]
        %v270 = vld [vmem:[%s195 + $0x124] sm:$0xf]
        %v271 = vld [vmem:[%s195 + $0x128] sm:$0xf]
        %v272 = vld [vmem:[%s195 + $0x12c] sm:$0xf]
        %v273 = vld [vmem:[%s195 + $0x130] sm:$0xf]
        %v274 = vld [vmem:[%s195 + $0x134] sm:$0xf]
        %v275 = vld [vmem:[%s195 + $0x138] sm:$0xf]
        %v276 = vld [vmem:[%s195 + $0x13c] sm:$0xf]
        %v277 = vld [vmem:[%s195 + $0x140] sm:$0xf]
        %v278 = vld [vmem:[%s195 + $0x144] sm:$0xf]
        %v279 = vld [vmem:[%s195 + $0x148] sm:$0xf]
        %v280 = vld [vmem:[%s195 + $0x14c] sm:$0xf]
        %v281 = vld [vmem:[%s195 + $0x150] sm:$0xf]
        %v282 = vld [vmem:[%s195 + $0x154] sm:$0xf]
        %v283 = vld [vmem:[%s195 + $0x158] sm:$0xf]
        %v284 = vld [vmem:[%s195 + $0x15c] sm:$0xf]
        %v285 = vld [vmem:[%s195 + $0x160] sm:$0xf]
        %v286 = vld [vmem:[%s195 + $0x164] sm:$0xf]
        %v287 = vld [vmem:[%s195 + $0x168] sm:$0xf]
        %v288 = vld [vmem:[%s195 + $0x16c] sm:$0xf]
        %v289 = vld [vmem:[%s195 + $0x170] sm:$0xf]
        %v290 = vld [vmem:[%s195 + $0x174] sm:$0xf]
        %v291 = vld [vmem:[%s195 + $0x178] sm:$0xf]
        %v292 = vld [vmem:[%s195 + $0x17c] sm:$0xf]
        %v293 = vld [vmem:[%s195 + $0x180] sm:$0xf]
        %v294 = vld [vmem:[%s195 + $0x184] sm:$0xf]
        %v295 = vld [vmem:[%s195 + $0x188] sm:$0xf]
        %v296 = vld [vmem:[%s195 + $0x18c] sm:$0xf]
        %v297 = vld [vmem:[%s195 + $0x190] sm:$0xf]
        %v298 = vld [vmem:[%s195 + $0x194] sm:$0xf]
        %v299 = vld [vmem:[%s195 + $0x198] sm:$0xf]
        %v300 = vld [vmem:[%s195 + $0x19c] sm:$0xf]
        %v301 = vld [vmem:[%s195 + $0x1a0] sm:$0xf]
        %v302 = vld [vmem:[%s195 + $0x1a4] sm:$0xf]
        %v303 = vld [vmem:[%s195 + $0x1a8] sm:$0xf]
        %v304 = vld [vmem:[%s195 + $0x1ac] sm:$0xf]
        %v305 = vld [vmem:[%s195 + $0x1b0] sm:$0xf]
        %v306 = vld [vmem:[%s195 + $0x1b4] sm:$0xf]
        %v307 = vld [vmem:[%s195 + $0x1b8] sm:$0xf]
        %v308 = vld [vmem:[%s195 + $0x1bc] sm:$0xf]
        %v309 = vld [vmem:[%s195 + $0x1c0] sm:$0xf]
        %v310 = vld [vmem:[%s195 + $0x1c4] sm:$0xf]
        %v311 = vld [vmem:[%s195 + $0x1c8] sm:$0xf]
        %v312 = vld [vmem:[%s195 + $0x1cc] sm:$0xf]
        %v313 = vld [vmem:[%s195 + $0x1d0] sm:$0xf]
        %v314 = vld [vmem:[%s195 + $0x1d4] sm:$0xf]
        %v315 = vld [vmem:[%s195 + $0x1d8] sm:$0xf]
        %v316 = vld [vmem:[%s195 + $0x1dc] sm:$0xf]
        %v317 = vld [vmem:[%s195 + $0x1e0] sm:$0xf]
        %v318 = vld [vmem:[%s195 + $0x1e4] sm:$0xf]
        %v319 = vld [vmem:[%s195 + $0x1e8] sm:$0xf]
        %v320 = vld [vmem:[%s195 + $0x1ec] sm:$0xf]
        %v321 = vld [vmem:[%s195 + $0x1f0] sm:$0xf]
        %v322 = vld [vmem:[%s195 + $0x1f4] sm:$0xf]
        %v323 = vld [vmem:[%s195 + $0x1f8] sm:$0xf]
        %v324 = vld [vmem:[%s195 + $0x1fc] sm:$0xf]
        %v325 = vld [vmem:[%s1] sm:$0xf]
        %v326 = vld [vmem:[%s1 + $0x4] sm:$0xf]
        %v327 = vld [vmem:[%s1 + $0x8] sm:$0xf]
        %v328 = vld [vmem:[%s1 + $0xc] sm:$0x3]
        %v457 = vunpack.c.l.b16 %v197
        %v458 = vunpack.c.l.b16 %v198
        %v459 = vunpack.c.l.b16 %v199
        %v460 = vunpack.c.l.b16 %v200
        %v461 = vunpack.c.l.b16 %v201
        %v462 = vunpack.c.l.b16 %v202
        %v463 = vunpack.c.l.b16 %v203
        %v464 = vunpack.c.l.b16 %v204
        %v465 = vunpack.c.l.b16 %v205
        %v466 = vunpack.c.l.b16 %v206
        %v467 = vunpack.c.l.b16 %v207
        %v468 = vunpack.c.l.b16 %v208
        %v469 = vunpack.c.l.b16 %v209
        %v470 = vunpack.c.l.b16 %v210
        %v471 = vunpack.c.l.b16 %v211
        %v472 = vunpack.c.l.b16 %v212
        %v473 = vunpack.c.l.b16 %v213
        %v474 = vunpack.c.l.b16 %v214
        %v475 = vunpack.c.l.b16 %v215
        %v476 = vunpack.c.l.b16 %v216
        %v477 = vunpack.c.l.b16 %v217
        %v478 = vunpack.c.l.b16 %v218
        %v479 = vunpack.c.l.b16 %v219
        %v480 = vunpack.c.l.b16 %v220
        %v481 = vunpack.c.l.b16 %v221
        %v482 = vunpack.c.l.b16 %v222
        %v483 = vunpack.c.l.b16 %v223
        %v484 = vunpack.c.l.b16 %v224
        %v485 = vunpack.c.l.b16 %v225
        %v486 = vunpack.c.l.b16 %v226
        %v487 = vunpack.c.l.b16 %v227
        %v488 = vunpack.c.l.b16 %v228
        %v489 = vunpack.c.l.b16 %v229
        %v490 = vunpack.c.l.b16 %v230
        %v491 = vunpack.c.l.b16 %v231
        %v492 = vunpack.c.l.b16 %v232
        %v493 = vunpack.c.l.b16 %v233
        %v494 = vunpack.c.l.b16 %v234
        %v495 = vunpack.c.l.b16 %v235
        %v496 = vunpack.c.l.b16 %v236
        %v497 = vunpack.c.l.b16 %v237
        %v498 = vunpack.c.l.b16 %v238
        %v499 = vunpack.c.l.b16 %v239
        %v500 = vunpack.c.l.b16 %v240
        %v501 = vunpack.c.l.b16 %v241
        %v502 = vunpack.c.l.b16 %v242
        %v503 = vunpack.c.l.b16 %v243
        %v504 = vunpack.c.l.b16 %v244
        %v505 = vunpack.c.l.b16 %v245
        %v506 = vunpack.c.l.b16 %v246
        %v507 = vunpack.c.l.b16 %v247
        %v508 = vunpack.c.l.b16 %v248
        %v509 = vunpack.c.l.b16 %v249
        %v510 = vunpack.c.l.b16 %v250
        %v511 = vunpack.c.l.b16 %v251
        %v512 = vunpack.c.l.b16 %v252
        %v513 = vunpack.c.l.b16 %v253
        %v514 = vunpack.c.l.b16 %v254
        %v515 = vunpack.c.l.b16 %v255
        %v516 = vunpack.c.l.b16 %v256
        %v517 = vunpack.c.l.b16 %v257
        %v518 = vunpack.c.l.b16 %v258
        %v519 = vunpack.c.l.b16 %v259
        %v520 = vunpack.c.l.b16 %v260
        %v521 = vunpack.c.l.b16 %v261
        %v522 = vunpack.c.l.b16 %v262
        %v523 = vunpack.c.l.b16 %v263
        %v524 = vunpack.c.l.b16 %v264
        %v525 = vunpack.c.l.b16 %v265
        %v526 = vunpack.c.l.b16 %v266
        %v527 = vunpack.c.l.b16 %v267
        %v528 = vunpack.c.l.b16 %v268
        %v529 = vunpack.c.l.b16 %v269
        %v530 = vunpack.c.l.b16 %v270
        %v531 = vunpack.c.l.b16 %v271
        %v532 = vunpack.c.l.b16 %v272
        %v533 = vunpack.c.l.b16 %v273
        %v534 = vunpack.c.l.b16 %v274
        %v535 = vunpack.c.l.b16 %v275
        %v536 = vunpack.c.l.b16 %v276
        %v537 = vunpack.c.l.b16 %v277
        %v538 = vunpack.c.l.b16 %v278
        %v539 = vunpack.c.l.b16 %v279
        %v540 = vunpack.c.l.b16 %v280
        %v541 = vunpack.c.l.b16 %v281
        %v542 = vunpack.c.l.b16 %v282
        %v543 = vunpack.c.l.b16 %v283
        %v544 = vunpack.c.l.b16 %v284
        %v545 = vunpack.c.l.b16 %v285
        %v546 = vunpack.c.l.b16 %v286
        %v547 = vunpack.c.l.b16 %v287
        %v548 = vunpack.c.l.b16 %v288
        %v549 = vunpack.c.l.b16 %v289
        %v550 = vunpack.c.l.b16 %v290
        %v551 = vunpack.c.l.b16 %v291
        %v552 = vunpack.c.l.b16 %v292
        %v553 = vunpack.c.l.b16 %v293
        %v554 = vunpack.c.l.b16 %v294
        %v555 = vunpack.c.l.b16 %v295
        %v556 = vunpack.c.l.b16 %v296
        %v557 = vunpack.c.l.b16 %v297
        %v558 = vunpack.c.l.b16 %v298
        %v559 = vunpack.c.l.b16 %v299
        %v560 = vunpack.c.l.b16 %v300
        %v561 = vunpack.c.l.b16 %v301
        %v562 = vunpack.c.l.b16 %v302
        %v563 = vunpack.c.l.b16 %v303
        %v564 = vunpack.c.l.b16 %v304
        %v565 = vunpack.c.l.b16 %v305
        %v566 = vunpack.c.l.b16 %v306
        %v567 = vunpack.c.l.b16 %v307
        %v568 = vunpack.c.l.b16 %v308
        %v569 = vunpack.c.l.b16 %v309
        %v570 = vunpack.c.l.b16 %v310
        %v571 = vunpack.c.l.b16 %v311
        %v572 = vunpack.c.l.b16 %v312
        %v573 = vunpack.c.l.b16 %v313
        %v574 = vunpack.c.l.b16 %v314
        %v575 = vunpack.c.l.b16 %v315
        %v576 = vunpack.c.l.b16 %v316
        %v577 = vunpack.c.l.b16 %v317
        %v578 = vunpack.c.l.b16 %v318
        %v579 = vunpack.c.l.b16 %v319
        %v580 = vunpack.c.l.b16 %v320
        %v581 = vunpack.c.l.b16 %v321
        %v582 = vunpack.c.l.b16 %v322
        %v583 = vunpack.c.l.b16 %v323
        %v584 = vunpack.c.l.b16 %v324
        %v585 = vpack.c.b16 %v458, %v457
        %v586 = vpack.c.b16 %v460, %v459
        %v587 = vpack.c.b16 %v462, %v461
        %v588 = vpack.c.b16 %v464, %v463
        %v589 = vpack.c.b16 %v466, %v465
        %v590 = vpack.c.b16 %v468, %v467
        %v591 = vpack.c.b16 %v470, %v469
        %v592 = vpack.c.b16 %v472, %v471
        %v593 = vpack.c.b16 %v474, %v473
        %v594 = vpack.c.b16 %v476, %v475
        %v595 = vpack.c.b16 %v478, %v477
        %v596 = vpack.c.b16 %v480, %v479
        %v597 = vpack.c.b16 %v482, %v481
        %v598 = vpack.c.b16 %v484, %v483
        %v599 = vpack.c.b16 %v486, %v485
        %v600 = vpack.c.b16 %v488, %v487
        %v601 = vpack.c.b16 %v490, %v489
        %v602 = vpack.c.b16 %v492, %v491
        %v603 = vpack.c.b16 %v494, %v493
        %v604 = vpack.c.b16 %v496, %v495
        %v605 = vpack.c.b16 %v498, %v497
        %v606 = vpack.c.b16 %v500, %v499
        %v607 = vpack.c.b16 %v502, %v501
        %v608 = vpack.c.b16 %v504, %v503
        %v609 = vpack.c.b16 %v506, %v505
        %v610 = vpack.c.b16 %v508, %v507
        %v611 = vpack.c.b16 %v510, %v509
        %v612 = vpack.c.b16 %v512, %v511
        %v613 = vpack.c.b16 %v514, %v513
        %v614 = vpack.c.b16 %v516, %v515
        %v615 = vpack.c.b16 %v518, %v517
        %v616 = vpack.c.b16 %v520, %v519
        %v617 = vpack.c.b16 %v522, %v521
        %v618 = vpack.c.b16 %v524, %v523
        %v619 = vpack.c.b16 %v526, %v525
        %v620 = vpack.c.b16 %v528, %v527
        %v621 = vpack.c.b16 %v530, %v529
        %v622 = vpack.c.b16 %v532, %v531
        %v623 = vpack.c.b16 %v534, %v533
        %v624 = vpack.c.b16 %v536, %v535
        %v625 = vpack.c.b16 %v538, %v537
        %v626 = vpack.c.b16 %v540, %v539
        %v627 = vpack.c.b16 %v542, %v541
        %v628 = vpack.c.b16 %v544, %v543
        %v629 = vpack.c.b16 %v546, %v545
        %v630 = vpack.c.b16 %v548, %v547
        %v631 = vpack.c.b16 %v550, %v549
        %v632 = vpack.c.b16 %v552, %v551
        %v633 = vpack.c.b16 %v554, %v553
        %v634 = vpack.c.b16 %v556, %v555
        %v635 = vpack.c.b16 %v558, %v557
        %v636 = vpack.c.b16 %v560, %v559
        %v637 = vpack.c.b16 %v562, %v561
        %v638 = vpack.c.b16 %v564, %v563
        %v639 = vpack.c.b16 %v566, %v565
        %v640 = vpack.c.b16 %v568, %v567
        %v641 = vpack.c.b16 %v570, %v569
        %v642 = vpack.c.b16 %v572, %v571
        %v643 = vpack.c.b16 %v574, %v573
        %v644 = vpack.c.b16 %v576, %v575
        %v645 = vpack.c.b16 %v578, %v577
        %v646 = vpack.c.b16 %v580, %v579
        %v647 = vpack.c.b16 %v582, %v581
        %v648 = vpack.c.b16 %v584, %v583
        %v653 = vunpack.c.l.b16 %v325
        %v654 = vunpack.c.l.b16 %v326
        %v655 = vunpack.c.l.b16 %v327
        %v656 = vunpack.c.l.b16 %v328
        %v657 = vpack.c.b16 %v654, %v653
        %v658 = vpack.c.b16 %v656, %v655
        %vm660 = vcmask 220160
        %v662 = vsel %vm660, %v585, 0
        %v665 = vsel %vm660, %v586, 0
        %v668 = vsel %vm660, %v587, 0
        %v671 = vsel %vm660, %v588, 0
        %v674 = vsel %vm660, %v589, 0
        %v677 = vsel %vm660, %v590, 0
        %v680 = vsel %vm660, %v591, 0
        %v683 = vsel %vm660, %v592, 0
        %v686 = vsel %vm660, %v593, 0
        %v689 = vsel %vm660, %v594, 0
        %v692 = vsel %vm660, %v595, 0
        %v695 = vsel %vm660, %v596, 0
        %v698 = vsel %vm660, %v597, 0
        %v701 = vsel %vm660, %v598, 0
        %v704 = vsel %vm660, %v599, 0
        %v707 = vsel %vm660, %v600, 0
        %v710 = vsel %vm660, %v601, 0
        %v713 = vsel %vm660, %v602, 0
        %v716 = vsel %vm660, %v603, 0
        %v719 = vsel %vm660, %v604, 0
        %v722 = vsel %vm660, %v605, 0
        %v725 = vsel %vm660, %v606, 0
        %v728 = vsel %vm660, %v607, 0
        %v731 = vsel %vm660, %v608, 0
        %v734 = vsel %vm660, %v609, 0
        %v737 = vsel %vm660, %v610, 0
        %v740 = vsel %vm660, %v611, 0
        %v743 = vsel %vm660, %v612, 0
        %v746 = vsel %vm660, %v613, 0
        %v749 = vsel %vm660, %v614, 0
        %v752 = vsel %vm660, %v615, 0
        %v755 = vsel %vm660, %v616, 0
        %v758 = vsel %vm660, %v617, 0
        %v761 = vsel %vm660, %v618, 0
        %v764 = vsel %vm660, %v619, 0
        %v767 = vsel %vm660, %v620, 0
        %v770 = vsel %vm660, %v621, 0
        %v773 = vsel %vm660, %v622, 0
        %v776 = vsel %vm660, %v623, 0
        %v779 = vsel %vm660, %v624, 0
        %v782 = vsel %vm660, %v625, 0
        %v785 = vsel %vm660, %v626, 0
        %v788 = vsel %vm660, %v627, 0
        %v791 = vsel %vm660, %v628, 0
        %v794 = vsel %vm660, %v629, 0
        %v797 = vsel %vm660, %v630, 0
        %v800 = vsel %vm660, %v631, 0
        %v803 = vsel %vm660, %v632, 0
        %v806 = vsel %vm660, %v633, 0
        %v809 = vsel %vm660, %v634, 0
        %v812 = vsel %vm660, %v635, 0
        %v815 = vsel %vm660, %v636, 0
        %v818 = vsel %vm660, %v637, 0
        %v821 = vsel %vm660, %v638, 0
        %v824 = vsel %vm660, %v639, 0
        %v827 = vsel %vm660, %v640, 0
        %v830 = vsel %vm660, %v641, 0
        %v833 = vsel %vm660, %v642, 0
        %v836 = vsel %vm660, %v643, 0
        %v839 = vsel %vm660, %v644, 0
        %v842 = vsel %vm660, %v645, 0
        %v845 = vsel %vm660, %v646, 0
        %v848 = vsel %vm660, %v647, 0
        %v851 = vsel %vm660, %v648, 0
        %vm853 = vcmask 1044480
        %vm854 = vcmask 1045504
        %v855 = vsel %vm853, 4294967295, 65535
        %v856 = vsel %vm854, %v855, 0
        %v858 = vand.u32 %v658, %v856
        %860 = vmatprep.subr.bf16.mxu0 0
        %861 = vmatpush1.bf16.msra.mxu0 %v657
        %862 = vmatprep.subr.bf16.mxu0 0
        %863 = vmatpush1.bf16.msra.mxu0 %v858
        %864 = vmatprep.subr.bf16.mxu0 0
        %865 = vmatpush1.bf16.msra.mxu0 0
        %866 = vmatprep.subr.bf16.mxu0 0
        %867 = vmatpush1.bf16.msra.mxu0 0
        %868 = vmatprep.subr.bf16.mxu0 0
        %869 = vmatpush1.bf16.msra.mxu0 0
        %870 = vmatprep.subr.bf16.mxu0 0
        %871 = vmatpush1.bf16.msra.mxu0 0
        %872 = vmatprep.subr.bf16.mxu0 0
        %873 = vmatpush1.bf16.msra.mxu0 0
        %874 = vmatprep.subr.bf16.mxu0 0
        %875 = vmatpush1.bf16.msra.mxu0 0
        %876 = vmatprep.subr.bf16.mxu0 0
        %877 = vmatpush1.bf16.msra.mxu0 0
        %878 = vmatprep.subr.bf16.mxu0 0
        %879 = vmatpush1.bf16.msra.mxu0 0
        %880 = vmatprep.subr.bf16.mxu0 0
        %881 = vmatpush1.bf16.msra.mxu0 0
        %882 = vmatprep.subr.bf16.mxu0 0
        %883 = vmatpush1.bf16.msra.mxu0 0
        %884 = vmatprep.subr.bf16.mxu0 0
        %885 = vmatpush1.bf16.msra.mxu0 0
        %886 = vmatprep.subr.bf16.mxu0 0
        %887 = vmatpush1.bf16.msra.mxu0 0
        %888 = vmatprep.subr.bf16.mxu0 0
        %889 = vmatpush1.bf16.msra.mxu0 0
        %890 = vmatprep.subr.bf16.mxu0 0
        %891 = vmatpush1.bf16.msra.mxu0 0
        %892 = vmatprep.mubr.bf16.mxu0 0
        %893 = vmatmul.mubr.bf16.gmra.mrb[0].mxu0 %v662
        %v894 = vpop.f32.mrb[0].mxu0
        %v895 = vadd.f32 0.0, %v894
        %v896 = vpop.f32.mrb[0].mxu0
        %v897 = vpop.f32.mrb[0].mxu0
        %v898 = vadd.f32 0.0, %v897
        %v899 = vpop.f32.mrb[0].mxu0
        %900 = vmatprep.mubr.bf16.mxu0 0
        %901 = vmatmul.mubr.bf16.gmra.mrb[0].mxu0 %v665
        %v902 = vpop.f32.mrb[0].mxu0
        %v903 = vadd.f32 0.0, %v902
        %v904 = vpop.f32.mrb[0].mxu0
        %v905 = vpop.f32.mrb[0].mxu0
        %v906 = vadd.f32 0.0, %v905
        %v907 = vpop.f32.mrb[0].mxu0
        %908 = vmatprep.mubr.bf16.mxu0 0
        %909 = vmatmul.mubr.bf16.gmra.mrb[0].mxu0 %v668
        %v910 = vpop.f32.mrb[0].mxu0
        %v911 = vadd.f32 0.0, %v910
        %v912 = vpop.f32.mrb[0].mxu0
        %v913 = vpop.f32.mrb[0].mxu0
        %v914 = vadd.f32 0.0, %v913
        %v915 = vpop.f32.mrb[0].mxu0
        %916 = vmatprep.mubr.bf16.mxu0 0
        %917 = vmatmul.mubr.bf16.gmra.mrb[0].mxu0 %v671
        %v918 = vpop.f32.mrb[0].mxu0
        %v919 = vadd.f32 0.0, %v918
        %v920 = vpop.f32.mrb[0].mxu0
        %v921 = vpop.f32.mrb[0].mxu0
        %v922 = vadd.f32 0.0, %v921
        %v923 = vpop.f32.mrb[0].mxu0
        %924 = vmatprep.mubr.bf16.mxu0 0
        %925 = vmatmul.mubr.bf16.gmra.mrb[0].mxu0 %v674
        %v926 = vpop.f32.mrb[0].mxu0
        %v927 = vadd.f32 0.0, %v926
        %v928 = vpop.f32.mrb[0].mxu0
        %v929 = vpop.f32.mrb[0].mxu0
        %v930 = vadd.f32 0.0, %v929
        %v931 = vpop.f32.mrb[0].mxu0
        %932 = vmatprep.mubr.bf16.mxu0 0
        %933 = vmatmul.mubr.bf16.gmra.mrb[0].mxu0 %v677
        %v934 = vpop.f32.mrb[0].mxu0
        %v935 = vadd.f32 0.0, %v934
        %v936 = vpop.f32.mrb[0].mxu0
        %v937 = vpop.f32.mrb[0].mxu0
        %v938 = vadd.f32 0.0, %v937
        %v939 = vpop.f32.mrb[0].mxu0
        %940 = vmatprep.mubr.bf16.mxu0 0
        %941 = vmatmul.mubr.bf16.gmra.mrb[0].mxu0 %v680
        %v942 = vpop.f32.mrb[0].mxu0
        %v943 = vadd.f32 0.0, %v942
        %v944 = vpop.f32.mrb[0].mxu0
        %v945 = vpop.f32.mrb[0].mxu0
        %v946 = vadd.f32 0.0, %v945
        %v947 = vpop.f32.mrb[0].mxu0
        %948 = vmatprep.mubr.bf16.mxu0 0
        %949 = vmatmul.mubr.bf16.gmra.mrb[0].mxu0 %v683
        %v950 = vpop.f32.mrb[0].mxu0
        %v951 = vadd.f32 0.0, %v950
        %v952 = vpop.f32.mrb[0].mxu0
        %v953 = vpop.f32.mrb[0].mxu0
        %v954 = vadd.f32 0.0, %v953
        %v955 = vpop.f32.mrb[0].mxu0
        %956 = vmatprep.mubr.bf16.mxu0 0
        %957 = vmatmul.mubr.bf16.gmra.mrb[0].mxu0 %v686
        %v958 = vpop.f32.mrb[0].mxu0
        %v959 = vadd.f32 0.0, %v958
        %v960 = vpop.f32.mrb[0].mxu0
        %v961 = vpop.f32.mrb[0].mxu0
        %v962 = vadd.f32 0.0, %v961
        %v963 = vpop.f32.mrb[0].mxu0
        %964 = vmatprep.mubr.bf16.mxu0 0
        %965 = vmatmul.mubr.bf16.gmra.mrb[0].mxu0 %v689
        %v966 = vpop.f32.mrb[0].mxu0
        %v967 = vadd.f32 0.0, %v966
        %v968 = vpop.f32.mrb[0].mxu0
        %v969 = vpop.f32.mrb[0].mxu0
        %v970 = vadd.f32 0.0, %v969
        %v971 = vpop.f32.mrb[0].mxu0
        %972 = vmatprep.mubr.bf16.mxu0 0
        %973 = vmatmul.mubr.bf16.gmra.mrb[0].mxu0 %v692
        %v974 = vpop.f32.mrb[0].mxu0
        %v975 = vadd.f32 0.0, %v974
        %v976 = vpop.f32.mrb[0].mxu0
        %v977 = vpop.f32.mrb[0].mxu0
        %v978 = vadd.f32 0.0, %v977
        %v979 = vpop.f32.mrb[0].mxu0
        %980 = vmatprep.mubr.bf16.mxu0 0
        %981 = vmatmul.mubr.bf16.gmra.mrb[0].mxu0 %v695
        %v982 = vpop.f32.mrb[0].mxu0
        %v983 = vadd.f32 0.0, %v982
        %v984 = vpop.f32.mrb[0].mxu0
        %v985 = vpop.f32.mrb[0].mxu0
        %v986 = vadd.f32 0.0, %v985
        %v987 = vpop.f32.mrb[0].mxu0
        %988 = vmatprep.mubr.bf16.mxu0 0
        %989 = vmatmul.mubr.bf16.gmra.mrb[0].mxu0 %v698
        %v990 = vpop.f32.mrb[0].mxu0
        %v991 = vadd.f32 0.0, %v990
        %v992 = vpop.f32.mrb[0].mxu0
        %v993 = vpop.f32.mrb[0].mxu0
        %v994 = vadd.f32 0.0, %v993
        %v995 = vpop.f32.mrb[0].mxu0
        %996 = vmatprep.mubr.bf16.mxu0 0
        %997 = vmatmul.mubr.bf16.gmra.mrb[0].mxu0 %v701
        %v998 = vpop.f32.mrb[0].mxu0
        %v999 = vadd.f32 0.0, %v998
        %v1000 = vpop.f32.mrb[0].mxu0
        %v1001 = vpop.f32.mrb[0].mxu0
        %v1002 = vadd.f32 0.0, %v1001
        %v1003 = vpop.f32.mrb[0].mxu0
        %1004 = vmatprep.mubr.bf16.mxu0 0
        %1005 = vmatmul.mubr.bf16.gmra.mrb[0].mxu0 %v704
        %v1006 = vpop.f32.mrb[0].mxu0
        %v1007 = vadd.f32 0.0, %v1006
        %v1008 = vpop.f32.mrb[0].mxu0
        %v1009 = vpop.f32.mrb[0].mxu0
        %v1010 = vadd.f32 0.0, %v1009
        %v1011 = vpop.f32.mrb[0].mxu0
        %1012 = vmatprep.mubr.bf16.mxu0 0
        %1013 = vmatmul.mubr.bf16.gmra.mrb[0].mxu0 %v707
        %v1014 = vpop.f32.mrb[0].mxu0
        %v1015 = vadd.f32 0.0, %v1014
        %v1016 = vpop.f32.mrb[0].mxu0
        %v1017 = vpop.f32.mrb[0].mxu0
        %v1018 = vadd.f32 0.0, %v1017
        %v1019 = vpop.f32.mrb[0].mxu0
        %1020 = vmatprep.mubr.bf16.mxu0 0
        %1021 = vmatmul.mubr.bf16.gmra.mrb[0].mxu0 %v710
        %v1022 = vpop.f32.mrb[0].mxu0
        %v1023 = vadd.f32 0.0, %v1022
        %v1024 = vpop.f32.mrb[0].mxu0
        %v1025 = vpop.f32.mrb[0].mxu0
        %v1026 = vadd.f32 0.0, %v1025
        %v1027 = vpop.f32.mrb[0].mxu0
        %1028 = vmatprep.mubr.bf16.mxu0 0
        %1029 = vmatmul.mubr.bf16.gmra.mrb[0].mxu0 %v713
        %v1030 = vpop.f32.mrb[0].mxu0
        %v1031 = vadd.f32 0.0, %v1030
        %v1032 = vpop.f32.mrb[0].mxu0
        %v1033 = vpop.f32.mrb[0].mxu0
        %v1034 = vadd.f32 0.0, %v1033
        %v1035 = vpop.f32.mrb[0].mxu0
        %1036 = vmatprep.mubr.bf16.mxu0 0
        %1037 = vmatmul.mubr.bf16.gmra.mrb[0].mxu0 %v716
        %v1038 = vpop.f32.mrb[0].mxu0
        %v1039 = vadd.f32 0.0, %v1038
        %v1040 = vpop.f32.mrb[0].mxu0
        %v1041 = vpop.f32.mrb[0].mxu0
        %v1042 = vadd.f32 0.0, %v1041
        %v1043 = vpop.f32.mrb[0].mxu0
        %1044 = vmatprep.mubr.bf16.mxu0 0
        %1045 = vmatmul.mubr.bf16.gmra.mrb[0].mxu0 %v719
        %v1046 = vpop.f32.mrb[0].mxu0
        %v1047 = vadd.f32 0.0, %v1046
        %v1048 = vpop.f32.mrb[0].mxu0
        %v1049 = vpop.f32.mrb[0].mxu0
        %v1050 = vadd.f32 0.0, %v1049
        %v1051 = vpop.f32.mrb[0].mxu0
        %1052 = vmatprep.mubr.bf16.mxu0 0
        %1053 = vmatmul.mubr.bf16.gmra.mrb[0].mxu0 %v722
        %v1054 = vpop.f32.mrb[0].mxu0
        %v1055 = vadd.f32 0.0, %v1054
        %v1056 = vpop.f32.mrb[0].mxu0
        %v1057 = vpop.f32.mrb[0].mxu0
        %v1058 = vadd.f32 0.0, %v1057
        %v1059 = vpop.f32.mrb[0].mxu0
        %1060 = vmatprep.mubr.bf16.mxu0 0
        %1061 = vmatmul.mubr.bf16.gmra.mrb[0].mxu0 %v725
        %v1062 = vpop.f32.mrb[0].mxu0
        %v1063 = vadd.f32 0.0, %v1062
        %v1064 = vpop.f32.mrb[0].mxu0
        %v1065 = vpop.f32.mrb[0].mxu0
        %v1066 = vadd.f32 0.0, %v1065
        %v1067 = vpop.f32.mrb[0].mxu0
        %1068 = vmatprep.mubr.bf16.mxu0 0
        %1069 = vmatmul.mubr.bf16.gmra.mrb[0].mxu0 %v728
        %v1070 = vpop.f32.mrb[0].mxu0
        %v1071 = vadd.f32 0.0, %v1070
        %v1072 = vpop.f32.mrb[0].mxu0
        %v1073 = vpop.f32.mrb[0].mxu0
        %v1074 = vadd.f32 0.0, %v1073
        %v1075 = vpop.f32.mrb[0].mxu0
        %1076 = vmatprep.mubr.bf16.mxu0 0
        %1077 = vmatmul.mubr.bf16.gmra.mrb[0].mxu0 %v731
        %v1078 = vpop.f32.mrb[0].mxu0
        %v1079 = vadd.f32 0.0, %v1078
        %v1080 = vpop.f32.mrb[0].mxu0
        %v1081 = vpop.f32.mrb[0].mxu0
        %v1082 = vadd.f32 0.0, %v1081
        %v1083 = vpop.f32.mrb[0].mxu0
        %1084 = vmatprep.mubr.bf16.mxu0 0
        %1085 = vmatmul.mubr.bf16.gmra.mrb[0].mxu0 %v734
        %v1086 = vpop.f32.mrb[0].mxu0
        %v1087 = vadd.f32 0.0, %v1086
        %v1088 = vpop.f32.mrb[0].mxu0
        %v1089 = vpop.f32.mrb[0].mxu0
        %v1090 = vadd.f32 0.0, %v1089
        %v1091 = vpop.f32.mrb[0].mxu0
        %1092 = vmatprep.mubr.bf16.mxu0 0
        %1093 = vmatmul.mubr.bf16.gmra.mrb[0].mxu0 %v737
        %v1094 = vpop.f32.mrb[0].mxu0
        %v1095 = vadd.f32 0.0, %v1094
        %v1096 = vpop.f32.mrb[0].mxu0
        %v1097 = vpop.f32.mrb[0].mxu0
        %v1098 = vadd.f32 0.0, %v1097
        %v1099 = vpop.f32.mrb[0].mxu0
        %1100 = vmatprep.mubr.bf16.mxu0 0
        %1101 = vmatmul.mubr.bf16.gmra.mrb[0].mxu0 %v740
        %v1102 = vpop.f32.mrb[0].mxu0
        %v1103 = vadd.f32 0.0, %v1102
        %v1104 = vpop.f32.mrb[0].mxu0
        %v1105 = vpop.f32.mrb[0].mxu0
        %v1106 = vadd.f32 0.0, %v1105
        %v1107 = vpop.f32.mrb[0].mxu0
        %1108 = vmatprep.mubr.bf16.mxu0 0
        %1109 = vmatmul.mubr.bf16.gmra.mrb[0].mxu0 %v743
        %v1110 = vpop.f32.mrb[0].mxu0
        %v1111 = vadd.f32 0.0, %v1110
        %v1112 = vpop.f32.mrb[0].mxu0
        %v1113 = vpop.f32.mrb[0].mxu0
        %v1114 = vadd.f32 0.0, %v1113
        %v1115 = vpop.f32.mrb[0].mxu0
        %1116 = vmatprep.mubr.bf16.mxu0 0
        %1117 = vmatmul.mubr.bf16.gmra.mrb[0].mxu0 %v746
        %v1118 = vpop.f32.mrb[0].mxu0
        %v1119 = vadd.f32 0.0, %v1118
        %v1120 = vpop.f32.mrb[0].mxu0
        %v1121 = vpop.f32.mrb[0].mxu0
        %v1122 = vadd.f32 0.0, %v1121
        %v1123 = vpop.f32.mrb[0].mxu0
        %1124 = vmatprep.mubr.bf16.mxu0 0
        %1125 = vmatmul.mubr.bf16.gmra.mrb[0].mxu0 %v749
        %v1126 = vpop.f32.mrb[0].mxu0
        %v1127 = vadd.f32 0.0, %v1126
        %v1128 = vpop.f32.mrb[0].mxu0
        %v1129 = vpop.f32.mrb[0].mxu0
        %v1130 = vadd.f32 0.0, %v1129
        %v1131 = vpop.f32.mrb[0].mxu0
        %1132 = vmatprep.mubr.bf16.mxu0 0
        %1133 = vmatmul.mubr.bf16.gmra.mrb[0].mxu0 %v752
        %v1134 = vpop.f32.mrb[0].mxu0
        %v1135 = vadd.f32 0.0, %v1134
        %v1136 = vpop.f32.mrb[0].mxu0
        %v1137 = vpop.f32.mrb[0].mxu0
        %v1138 = vadd.f32 0.0, %v1137
        %v1139 = vpop.f32.mrb[0].mxu0
        %1140 = vmatprep.mubr.bf16.mxu0 0
        %1141 = vmatmul.mubr.bf16.gmra.mrb[0].mxu0 %v755
        %v1142 = vpop.f32.mrb[0].mxu0
        %v1143 = vadd.f32 0.0, %v1142
        %v1144 = vpop.f32.mrb[0].mxu0
        %v1145 = vpop.f32.mrb[0].mxu0
        %v1146 = vadd.f32 0.0, %v1145
        %v1147 = vpop.f32.mrb[0].mxu0
        %1148 = vmatprep.mubr.bf16.mxu0 0
        %1149 = vmatmul.mubr.bf16.gmra.mrb[0].mxu0 %v758
        %v1150 = vpop.f32.mrb[0].mxu0
        %v1151 = vadd.f32 0.0, %v1150
        %v1152 = vpop.f32.mrb[0].mxu0
        %v1153 = vpop.f32.mrb[0].mxu0
        %v1154 = vadd.f32 0.0, %v1153
        %v1155 = vpop.f32.mrb[0].mxu0
        %1156 = vmatprep.mubr.bf16.mxu0 0
        %1157 = vmatmul.mubr.bf16.gmra.mrb[0].mxu0 %v761
        %v1158 = vpop.f32.mrb[0].mxu0
        %v1159 = vadd.f32 0.0, %v1158
        %v1160 = vpop.f32.mrb[0].mxu0
        %v1161 = vpop.f32.mrb[0].mxu0
        %v1162 = vadd.f32 0.0, %v1161
        %v1163 = vpop.f32.mrb[0].mxu0
        %1164 = vmatprep.mubr.bf16.mxu0 0
        %1165 = vmatmul.mubr.bf16.gmra.mrb[0].mxu0 %v764
        %v1166 = vpop.f32.mrb[0].mxu0
        %v1167 = vadd.f32 0.0, %v1166
        %v1168 = vpop.f32.mrb[0].mxu0
        %v1169 = vpop.f32.mrb[0].mxu0
        %v1170 = vadd.f32 0.0, %v1169
        %v1171 = vpop.f32.mrb[0].mxu0
        %1172 = vmatprep.mubr.bf16.mxu0 0
        %1173 = vmatmul.mubr.bf16.gmra.mrb[0].mxu0 %v767
        %v1174 = vpop.f32.mrb[0].mxu0
        %v1175 = vadd.f32 0.0, %v1174
        %v1176 = vpop.f32.mrb[0].mxu0
        %v1177 = vpop.f32.mrb[0].mxu0
        %v1178 = vadd.f32 0.0, %v1177
        %v1179 = vpop.f32.mrb[0].mxu0
        %1180 = vmatprep.mubr.bf16.mxu0 0
        %1181 = vmatmul.mubr.bf16.gmra.mrb[0].mxu0 %v770
        %v1182 = vpop.f32.mrb[0].mxu0
        %v1183 = vadd.f32 0.0, %v1182
        %v1184 = vpop.f32.mrb[0].mxu0
        %v1185 = vpop.f32.mrb[0].mxu0
        %v1186 = vadd.f32 0.0, %v1185
        %v1187 = vpop.f32.mrb[0].mxu0
        %1188 = vmatprep.mubr.bf16.mxu0 0
        %1189 = vmatmul.mubr.bf16.gmra.mrb[0].mxu0 %v773
        %v1190 = vpop.f32.mrb[0].mxu0
        %v1191 = vadd.f32 0.0, %v1190
        %v1192 = vpop.f32.mrb[0].mxu0
        %v1193 = vpop.f32.mrb[0].mxu0
        %v1194 = vadd.f32 0.0, %v1193
        %v1195 = vpop.f32.mrb[0].mxu0
        %1196 = vmatprep.mubr.bf16.mxu0 0
        %1197 = vmatmul.mubr.bf16.gmra.mrb[0].mxu0 %v776
        %v1198 = vpop.f32.mrb[0].mxu0
        %v1199 = vadd.f32 0.0, %v1198
        %v1200 = vpop.f32.mrb[0].mxu0
        %v1201 = vpop.f32.mrb[0].mxu0
        %v1202 = vadd.f32 0.0, %v1201
        %v1203 = vpop.f32.mrb[0].mxu0
        %1204 = vmatprep.mubr.bf16.mxu0 0
        %1205 = vmatmul.mubr.bf16.gmra.mrb[0].mxu0 %v779
        %v1206 = vpop.f32.mrb[0].mxu0
        %v1207 = vadd.f32 0.0, %v1206
        %v1208 = vpop.f32.mrb[0].mxu0
        %v1209 = vpop.f32.mrb[0].mxu0
        %v1210 = vadd.f32 0.0, %v1209
        %v1211 = vpop.f32.mrb[0].mxu0
        %1212 = vmatprep.mubr.bf16.mxu0 0
        %1213 = vmatmul.mubr.bf16.gmra.mrb[0].mxu0 %v782
        %v1214 = vpop.f32.mrb[0].mxu0
        %v1215 = vadd.f32 0.0, %v1214
        %v1216 = vpop.f32.mrb[0].mxu0
        %v1217 = vpop.f32.mrb[0].mxu0
        %v1218 = vadd.f32 0.0, %v1217
        %v1219 = vpop.f32.mrb[0].mxu0
        %1220 = vmatprep.mubr.bf16.mxu0 0
        %1221 = vmatmul.mubr.bf16.gmra.mrb[0].mxu0 %v785
        %v1222 = vpop.f32.mrb[0].mxu0
        %v1223 = vadd.f32 0.0, %v1222
        %v1224 = vpop.f32.mrb[0].mxu0
        %v1225 = vpop.f32.mrb[0].mxu0
        %v1226 = vadd.f32 0.0, %v1225
        %v1227 = vpop.f32.mrb[0].mxu0
        %1228 = vmatprep.mubr.bf16.mxu0 0
        %1229 = vmatmul.mubr.bf16.gmra.mrb[0].mxu0 %v788
        %v1230 = vpop.f32.mrb[0].mxu0
        %v1231 = vadd.f32 0.0, %v1230
        %v1232 = vpop.f32.mrb[0].mxu0
        %v1233 = vpop.f32.mrb[0].mxu0
        %v1234 = vadd.f32 0.0, %v1233
        %v1235 = vpop.f32.mrb[0].mxu0
        %1236 = vmatprep.mubr.bf16.mxu0 0
        %1237 = vmatmul.mubr.bf16.gmra.mrb[0].mxu0 %v791
        %v1238 = vpop.f32.mrb[0].mxu0
        %v1239 = vadd.f32 0.0, %v1238
        %v1240 = vpop.f32.mrb[0].mxu0
        %v1241 = vpop.f32.mrb[0].mxu0
        %v1242 = vadd.f32 0.0, %v1241
        %v1243 = vpop.f32.mrb[0].mxu0
        %1244 = vmatprep.mubr.bf16.mxu0 0
        %1245 = vmatmul.mubr.bf16.gmra.mrb[0].mxu0 %v794
        %v1246 = vpop.f32.mrb[0].mxu0
        %v1247 = vadd.f32 0.0, %v1246
        %v1248 = vpop.f32.mrb[0].mxu0
        %v1249 = vpop.f32.mrb[0].mxu0
        %v1250 = vadd.f32 0.0, %v1249
        %v1251 = vpop.f32.mrb[0].mxu0
        %1252 = vmatprep.mubr.bf16.mxu0 0
        %1253 = vmatmul.mubr.bf16.gmra.mrb[0].mxu0 %v797
        %v1254 = vpop.f32.mrb[0].mxu0
        %v1255 = vadd.f32 0.0, %v1254
        %v1256 = vpop.f32.mrb[0].mxu0
        %v1257 = vpop.f32.mrb[0].mxu0
        %v1258 = vadd.f32 0.0, %v1257
        %v1259 = vpop.f32.mrb[0].mxu0
        %1260 = vmatprep.mubr.bf16.mxu0 0
        %1261 = vmatmul.mubr.bf16.gmra.mrb[0].mxu0 %v800
        %v1262 = vpop.f32.mrb[0].mxu0
        %v1263 = vadd.f32 0.0, %v1262
        %v1264 = vpop.f32.mrb[0].mxu0
        %v1265 = vpop.f32.mrb[0].mxu0
        %v1266 = vadd.f32 0.0, %v1265
        %v1267 = vpop.f32.mrb[0].mxu0
        %1268 = vmatprep.mubr.bf16.mxu0 0
        %1269 = vmatmul.mubr.bf16.gmra.mrb[0].mxu0 %v803
        %v1270 = vpop.f32.mrb[0].mxu0
        %v1271 = vadd.f32 0.0, %v1270
        %v1272 = vpop.f32.mrb[0].mxu0
        %v1273 = vpop.f32.mrb[0].mxu0
        %v1274 = vadd.f32 0.0, %v1273
        %v1275 = vpop.f32.mrb[0].mxu0
        %1276 = vmatprep.mubr.bf16.mxu0 0
        %1277 = vmatmul.mubr.bf16.gmra.mrb[0].mxu0 %v806
        %v1278 = vpop.f32.mrb[0].mxu0
        %v1279 = vadd.f32 0.0, %v1278
        %v1280 = vpop.f32.mrb[0].mxu0
        %v1281 = vpop.f32.mrb[0].mxu0
        %v1282 = vadd.f32 0.0, %v1281
        %v1283 = vpop.f32.mrb[0].mxu0
        %1284 = vmatprep.mubr.bf16.mxu0 0
        %1285 = vmatmul.mubr.bf16.gmra.mrb[0].mxu0 %v809
        %v1286 = vpop.f32.mrb[0].mxu0
        %v1287 = vadd.f32 0.0, %v1286
        %v1288 = vpop.f32.mrb[0].mxu0
        %v1289 = vpop.f32.mrb[0].mxu0
        %v1290 = vadd.f32 0.0, %v1289
        %v1291 = vpop.f32.mrb[0].mxu0
        %1292 = vmatprep.mubr.bf16.mxu0 0
        %1293 = vmatmul.mubr.bf16.gmra.mrb[0].mxu0 %v812
        %v1294 = vpop.f32.mrb[0].mxu0
        %v1295 = vadd.f32 0.0, %v1294
        %v1296 = vpop.f32.mrb[0].mxu0
        %v1297 = vpop.f32.mrb[0].mxu0
        %v1298 = vadd.f32 0.0, %v1297
        %v1299 = vpop.f32.mrb[0].mxu0
        %1300 = vmatprep.mubr.bf16.mxu0 0
        %1301 = vmatmul.mubr.bf16.gmra.mrb[0].mxu0 %v815
        %v1302 = vpop.f32.mrb[0].mxu0
        %v1303 = vadd.f32 0.0, %v1302
        %v1304 = vpop.f32.mrb[0].mxu0
        %v1305 = vpop.f32.mrb[0].mxu0
        %v1306 = vadd.f32 0.0, %v1305
        %v1307 = vpop.f32.mrb[0].mxu0
        %1308 = vmatprep.mubr.bf16.mxu0 0
        %1309 = vmatmul.mubr.bf16.gmra.mrb[0].mxu0 %v818
        %v1310 = vpop.f32.mrb[0].mxu0
        %v1311 = vadd.f32 0.0, %v1310
        %v1312 = vpop.f32.mrb[0].mxu0
        %v1313 = vpop.f32.mrb[0].mxu0
        %v1314 = vadd.f32 0.0, %v1313
        %v1315 = vpop.f32.mrb[0].mxu0
        %1316 = vmatprep.mubr.bf16.mxu0 0
        %1317 = vmatmul.mubr.bf16.gmra.mrb[0].mxu0 %v821
        %v1318 = vpop.f32.mrb[0].mxu0
        %v1319 = vadd.f32 0.0, %v1318
        %v1320 = vpop.f32.mrb[0].mxu0
        %v1321 = vpop.f32.mrb[0].mxu0
        %v1322 = vadd.f32 0.0, %v1321
        %v1323 = vpop.f32.mrb[0].mxu0
        %1324 = vmatprep.mubr.bf16.mxu0 0
        %1325 = vmatmul.mubr.bf16.gmra.mrb[0].mxu0 %v824
        %v1326 = vpop.f32.mrb[0].mxu0
        %v1327 = vadd.f32 0.0, %v1326
        %v1328 = vpop.f32.mrb[0].mxu0
        %v1329 = vpop.f32.mrb[0].mxu0
        %v1330 = vadd.f32 0.0, %v1329
        %v1331 = vpop.f32.mrb[0].mxu0
        %1332 = vmatprep.mubr.bf16.mxu0 0
        %1333 = vmatmul.mubr.bf16.gmra.mrb[0].mxu0 %v827
        %v1334 = vpop.f32.mrb[0].mxu0
        %v1335 = vadd.f32 0.0, %v1334
        %v1336 = vpop.f32.mrb[0].mxu0
        %v1337 = vpop.f32.mrb[0].mxu0
        %v1338 = vadd.f32 0.0, %v1337
        %v1339 = vpop.f32.mrb[0].mxu0
        %1340 = vmatprep.mubr.bf16.mxu0 0
        %1341 = vmatmul.mubr.bf16.gmra.mrb[0].mxu0 %v830
        %v1342 = vpop.f32.mrb[0].mxu0
        %v1343 = vadd.f32 0.0, %v1342
        %v1344 = vpop.f32.mrb[0].mxu0
        %v1345 = vpop.f32.mrb[0].mxu0
        %v1346 = vadd.f32 0.0, %v1345
        %v1347 = vpop.f32.mrb[0].mxu0
        %1348 = vmatprep.mubr.bf16.mxu0 0
        %1349 = vmatmul.mubr.bf16.gmra.mrb[0].mxu0 %v833
        %v1350 = vpop.f32.mrb[0].mxu0
        %v1351 = vadd.f32 0.0, %v1350
        %v1352 = vpop.f32.mrb[0].mxu0
        %v1353 = vpop.f32.mrb[0].mxu0
        %v1354 = vadd.f32 0.0, %v1353
        %v1355 = vpop.f32.mrb[0].mxu0
        %1356 = vmatprep.mubr.bf16.mxu0 0
        %1357 = vmatmul.mubr.bf16.gmra.mrb[0].mxu0 %v836
        %v1358 = vpop.f32.mrb[0].mxu0
        %v1359 = vadd.f32 0.0, %v1358
        %v1360 = vpop.f32.mrb[0].mxu0
        %v1361 = vpop.f32.mrb[0].mxu0
        %v1362 = vadd.f32 0.0, %v1361
        %v1363 = vpop.f32.mrb[0].mxu0
        %1364 = vmatprep.mubr.bf16.mxu0 0
        %1365 = vmatmul.mubr.bf16.gmra.mrb[0].mxu0 %v839
        %v1366 = vpop.f32.mrb[0].mxu0
        %v1367 = vadd.f32 0.0, %v1366
        %v1368 = vpop.f32.mrb[0].mxu0
        %v1369 = vpop.f32.mrb[0].mxu0
        %v1370 = vadd.f32 0.0, %v1369
        %v1371 = vpop.f32.mrb[0].mxu0
        %1372 = vmatprep.mubr.bf16.mxu0 0
        %1373 = vmatmul.mubr.bf16.gmra.mrb[0].mxu0 %v842
        %v1374 = vpop.f32.mrb[0].mxu0
        %v1375 = vadd.f32 0.0, %v1374
        %v1376 = vpop.f32.mrb[0].mxu0
        %v1377 = vpop.f32.mrb[0].mxu0
        %v1378 = vadd.f32 0.0, %v1377
        %v1379 = vpop.f32.mrb[0].mxu0
        %1380 = vmatprep.mubr.bf16.mxu0 0
        %1381 = vmatmul.mubr.bf16.gmra.mrb[0].mxu0 %v845
        %v1382 = vpop.f32.mrb[0].mxu0
        %v1383 = vadd.f32 0.0, %v1382
        %v1384 = vpop.f32.mrb[0].mxu0
        %v1385 = vpop.f32.mrb[0].mxu0
        %v1386 = vadd.f32 0.0, %v1385
        %v1387 = vpop.f32.mrb[0].mxu0
        %1388 = vmatprep.mubr.bf16.mxu0 0
        %1389 = vmatmul.mubr.bf16.gmra.mrb[0].mxu0 %v848
        %v1390 = vpop.f32.mrb[0].mxu0
        %v1391 = vadd.f32 0.0, %v1390
        %v1392 = vpop.f32.mrb[0].mxu0
        %v1393 = vpop.f32.mrb[0].mxu0
        %v1394 = vadd.f32 0.0, %v1393
        %v1395 = vpop.f32.mrb[0].mxu0
        %1396 = vmatprep.mubr.bf16.mxu0 0
        %1397 = vmatmul.mubr.bf16.gmra.mrb[0].mxu0 %v851
        %v1398 = vpop.f32.mrb[0].mxu0
        %v1399 = vadd.f32 0.0, %v1398
        %v1400 = vpop.f32.mrb[0].mxu0
        %v1401 = vpop.f32.mrb[0].mxu0
        %v1402 = vadd.f32 0.0, %v1401
        %v1403 = vpop.f32.mrb[0].mxu0
        %1404 = vdwg.mxu0
        %v1405 = vld [vmem:[%s2] sm:$0x1]
        %v1407 = vlaneseq
        %v1408 = vshrl.u32 %v1407, 7
        %v1409 = vsub.s32 0, %v1408
        %v1410 = vrot.slane %v1405, %v1409
        %v1412 = vmul.f32 %v895, %v1410
        %v1413 = vmul.f32 %v898, %v1410
        %v1414 = vmul.f32 %v903, %v1410
        %v1415 = vmul.f32 %v906, %v1410
        %v1416 = vmul.f32 %v911, %v1410
        %v1417 = vmul.f32 %v914, %v1410
        %v1418 = vmul.f32 %v919, %v1410
        %v1419 = vmul.f32 %v922, %v1410
        %v1420 = vmul.f32 %v927, %v1410
        %v1421 = vmul.f32 %v930, %v1410
        %v1422 = vmul.f32 %v935, %v1410
        %v1423 = vmul.f32 %v938, %v1410
        %v1424 = vmul.f32 %v943, %v1410
        %v1425 = vmul.f32 %v946, %v1410
        %v1426 = vmul.f32 %v951, %v1410
        %v1427 = vmul.f32 %v954, %v1410
        %v1428 = vmul.f32 %v959, %v1410
        %v1429 = vmul.f32 %v962, %v1410
        %v1430 = vmul.f32 %v967, %v1410
        %v1431 = vmul.f32 %v970, %v1410
        %v1432 = vmul.f32 %v975, %v1410
        %v1433 = vmul.f32 %v978, %v1410
        %v1434 = vmul.f32 %v983, %v1410
        %v1435 = vmul.f32 %v986, %v1410
        %v1436 = vmul.f32 %v991, %v1410
        %v1437 = vmul.f32 %v994, %v1410
        %v1438 = vmul.f32 %v999, %v1410
        %v1439 = vmul.f32 %v1002, %v1410
        %v1440 = vmul.f32 %v1007, %v1410
        %v1441 = vmul.f32 %v1010, %v1410
        %v1442 = vmul.f32 %v1015, %v1410
        %v1443 = vmul.f32 %v1018, %v1410
        %v1444 = vmul.f32 %v1023, %v1410
        %v1445 = vmul.f32 %v1026, %v1410
        %v1446 = vmul.f32 %v1031, %v1410
        %v1447 = vmul.f32 %v1034, %v1410
        %v1448 = vmul.f32 %v1039, %v1410
        %v1449 = vmul.f32 %v1042, %v1410
        %v1450 = vmul.f32 %v1047, %v1410
        %v1451 = vmul.f32 %v1050, %v1410
        %v1452 = vmul.f32 %v1055, %v1410
        %v1453 = vmul.f32 %v1058, %v1410
        %v1454 = vmul.f32 %v1063, %v1410
        %v1455 = vmul.f32 %v1066, %v1410
        %v1456 = vmul.f32 %v1071, %v1410
        %v1457 = vmul.f32 %v1074, %v1410
        %v1458 = vmul.f32 %v1079, %v1410
        %v1459 = vmul.f32 %v1082, %v1410
        %v1460 = vmul.f32 %v1087, %v1410
        %v1461 = vmul.f32 %v1090, %v1410
        %v1462 = vmul.f32 %v1095, %v1410
        %v1463 = vmul.f32 %v1098, %v1410
        %v1464 = vmul.f32 %v1103, %v1410
        %v1465 = vmul.f32 %v1106, %v1410
        %v1466 = vmul.f32 %v1111, %v1410
        %v1467 = vmul.f32 %v1114, %v1410
        %v1468 = vmul.f32 %v1119, %v1410
        %v1469 = vmul.f32 %v1122, %v1410
        %v1470 = vmul.f32 %v1127, %v1410
        %v1471 = vmul.f32 %v1130, %v1410
        %v1472 = vmul.f32 %v1135, %v1410
        %v1473 = vmul.f32 %v1138, %v1410
        %v1474 = vmul.f32 %v1143, %v1410
        %v1475 = vmul.f32 %v1146, %v1410
        %v1476 = vmul.f32 %v1151, %v1410
        %v1477 = vmul.f32 %v1154, %v1410
        %v1478 = vmul.f32 %v1159, %v1410
        %v1479 = vmul.f32 %v1162, %v1410
        %v1480 = vmul.f32 %v1167, %v1410
        %v1481 = vmul.f32 %v1170, %v1410
        %v1482 = vmul.f32 %v1175, %v1410
        %v1483 = vmul.f32 %v1178, %v1410
        %v1484 = vmul.f32 %v1183, %v1410
        %v1485 = vmul.f32 %v1186, %v1410
        %v1486 = vmul.f32 %v1191, %v1410
        %v1487 = vmul.f32 %v1194, %v1410
        %v1488 = vmul.f32 %v1199, %v1410
        %v1489 = vmul.f32 %v1202, %v1410
        %v1490 = vmul.f32 %v1207, %v1410
        %v1491 = vmul.f32 %v1210, %v1410
        %v1492 = vmul.f32 %v1215, %v1410
        %v1493 = vmul.f32 %v1218, %v1410
        %v1494 = vmul.f32 %v1223, %v1410
        %v1495 = vmul.f32 %v1226, %v1410
        %v1496 = vmul.f32 %v1231, %v1410
        %v1497 = vmul.f32 %v1234, %v1410
        %v1498 = vmul.f32 %v1239, %v1410
        %v1499 = vmul.f32 %v1242, %v1410
        %v1500 = vmul.f32 %v1247, %v1410
        %v1501 = vmul.f32 %v1250, %v1410
        %v1502 = vmul.f32 %v1255, %v1410
        %v1503 = vmul.f32 %v1258, %v1410
        %v1504 = vmul.f32 %v1263, %v1410
        %v1505 = vmul.f32 %v1266, %v1410
        %v1506 = vmul.f32 %v1271, %v1410
        %v1507 = vmul.f32 %v1274, %v1410
        %v1508 = vmul.f32 %v1279, %v1410
        %v1509 = vmul.f32 %v1282, %v1410
        %v1510 = vmul.f32 %v1287, %v1410
        %v1511 = vmul.f32 %v1290, %v1410
        %v1512 = vmul.f32 %v1295, %v1410
        %v1513 = vmul.f32 %v1298, %v1410
        %v1514 = vmul.f32 %v1303, %v1410
        %v1515 = vmul.f32 %v1306, %v1410
        %v1516 = vmul.f32 %v1311, %v1410
        %v1517 = vmul.f32 %v1314, %v1410
        %v1518 = vmul.f32 %v1319, %v1410
        %v1519 = vmul.f32 %v1322, %v1410
        %v1520 = vmul.f32 %v1327, %v1410
        %v1521 = vmul.f32 %v1330, %v1410
        %v1522 = vmul.f32 %v1335, %v1410
        %v1523 = vmul.f32 %v1338, %v1410
        %v1524 = vmul.f32 %v1343, %v1410
        %v1525 = vmul.f32 %v1346, %v1410
        %v1526 = vmul.f32 %v1351, %v1410
        %v1527 = vmul.f32 %v1354, %v1410
        %v1528 = vmul.f32 %v1359, %v1410
        %v1529 = vmul.f32 %v1362, %v1410
        %v1530 = vmul.f32 %v1367, %v1410
        %v1531 = vmul.f32 %v1370, %v1410
        %v1532 = vmul.f32 %v1375, %v1410
        %v1533 = vmul.f32 %v1378, %v1410
        %v1534 = vmul.f32 %v1383, %v1410
        %v1535 = vmul.f32 %v1386, %v1410
        %v1536 = vmul.f32 %v1391, %v1410
        %v1537 = vmul.f32 %v1394, %v1410
        %v1538 = vmul.f32 %v1399, %v1410
        %v1539 = vmul.f32 %v1402, %v1410
        %v1540 = vld [vmem:[%s3] sm:$0x1]
        %v1542 = vlaneseq
        %v1543 = vshrl.u32 %v1542, 7
        %v1544 = vsub.s32 0, %v1543
        %v1545 = vrot.slane %v1540, %v1544
        %v1547 = vadd.f32 %v1412, %v1545
        %v1548 = vadd.f32 %v1413, %v1545
        %v1549 = vadd.f32 %v1414, %v1545
        %v1550 = vadd.f32 %v1415, %v1545
        %v1551 = vadd.f32 %v1416, %v1545
        %v1552 = vadd.f32 %v1417, %v1545
        %v1553 = vadd.f32 %v1418, %v1545
        %v1554 = vadd.f32 %v1419, %v1545
        %v1555 = vadd.f32 %v1420, %v1545
        %v1556 = vadd.f32 %v1421, %v1545
        %v1557 = vadd.f32 %v1422, %v1545
        %v1558 = vadd.f32 %v1423, %v1545
        %v1559 = vadd.f32 %v1424, %v1545
        %v1560 = vadd.f32 %v1425, %v1545
        %v1561 = vadd.f32 %v1426, %v1545
        %v1562 = vadd.f32 %v1427, %v1545
        %v1563 = vadd.f32 %v1428, %v1545
        %v1564 = vadd.f32 %v1429, %v1545
        %v1565 = vadd.f32 %v1430, %v1545
        %v1566 = vadd.f32 %v1431, %v1545
        %v1567 = vadd.f32 %v1432, %v1545
        %v1568 = vadd.f32 %v1433, %v1545
        %v1569 = vadd.f32 %v1434, %v1545
        %v1570 = vadd.f32 %v1435, %v1545
        %v1571 = vadd.f32 %v1436, %v1545
        %v1572 = vadd.f32 %v1437, %v1545
        %v1573 = vadd.f32 %v1438, %v1545
        %v1574 = vadd.f32 %v1439, %v1545
        %v1575 = vadd.f32 %v1440, %v1545
        %v1576 = vadd.f32 %v1441, %v1545
        %v1577 = vadd.f32 %v1442, %v1545
        %v1578 = vadd.f32 %v1443, %v1545
        %v1579 = vadd.f32 %v1444, %v1545
        %v1580 = vadd.f32 %v1445, %v1545
        %v1581 = vadd.f32 %v1446, %v1545
        %v1582 = vadd.f32 %v1447, %v1545
        %v1583 = vadd.f32 %v1448, %v1545
        %v1584 = vadd.f32 %v1449, %v1545
        %v1585 = vadd.f32 %v1450, %v1545
        %v1586 = vadd.f32 %v1451, %v1545
        %v1587 = vadd.f32 %v1452, %v1545
        %v1588 = vadd.f32 %v1453, %v1545
        %v1589 = vadd.f32 %v1454, %v1545
        %v1590 = vadd.f32 %v1455, %v1545
        %v1591 = vadd.f32 %v1456, %v1545
        %v1592 = vadd.f32 %v1457, %v1545
        %v1593 = vadd.f32 %v1458, %v1545
        %v1594 = vadd.f32 %v1459, %v1545
        %v1595 = vadd.f32 %v1460, %v1545
        %v1596 = vadd.f32 %v1461, %v1545
        %v1597 = vadd.f32 %v1462, %v1545
        %v1598 = vadd.f32 %v1463, %v1545
        %v1599 = vadd.f32 %v1464, %v1545
        %v1600 = vadd.f32 %v1465, %v1545
        %v1601 = vadd.f32 %v1466, %v1545
        %v1602 = vadd.f32 %v1467, %v1545
        %v1603 = vadd.f32 %v1468, %v1545
        %v1604 = vadd.f32 %v1469, %v1545
        %v1605 = vadd.f32 %v1470, %v1545
        %v1606 = vadd.f32 %v1471, %v1545
        %v1607 = vadd.f32 %v1472, %v1545
        %v1608 = vadd.f32 %v1473, %v1545
        %v1609 = vadd.f32 %v1474, %v1545
        %v1610 = vadd.f32 %v1475, %v1545
        %v1611 = vadd.f32 %v1476, %v1545
        %v1612 = vadd.f32 %v1477, %v1545
        %v1613 = vadd.f32 %v1478, %v1545
        %v1614 = vadd.f32 %v1479, %v1545
        %v1615 = vadd.f32 %v1480, %v1545
        %v1616 = vadd.f32 %v1481, %v1545
        %v1617 = vadd.f32 %v1482, %v1545
        %v1618 = vadd.f32 %v1483, %v1545
        %v1619 = vadd.f32 %v1484, %v1545
        %v1620 = vadd.f32 %v1485, %v1545
        %v1621 = vadd.f32 %v1486, %v1545
        %v1622 = vadd.f32 %v1487, %v1545
        %v1623 = vadd.f32 %v1488, %v1545
        %v1624 = vadd.f32 %v1489, %v1545
        %v1625 = vadd.f32 %v1490, %v1545
        %v1626 = vadd.f32 %v1491, %v1545
        %v1627 = vadd.f32 %v1492, %v1545
        %v1628 = vadd.f32 %v1493, %v1545
        %v1629 = vadd.f32 %v1494, %v1545
        %v1630 = vadd.f32 %v1495, %v1545
        %v1631 = vadd.f32 %v1496, %v1545
        %v1632 = vadd.f32 %v1497, %v1545
        %v1633 = vadd.f32 %v1498, %v1545
        %v1634 = vadd.f32 %v1499, %v1545
        %v1635 = vadd.f32 %v1500, %v1545
        %v1636 = vadd.f32 %v1501, %v1545
        %v1637 = vadd.f32 %v1502, %v1545
        %v1638 = vadd.f32 %v1503, %v1545
        %v1639 = vadd.f32 %v1504, %v1545
        %v1640 = vadd.f32 %v1505, %v1545
        %v1641 = vadd.f32 %v1506, %v1545
        %v1642 = vadd.f32 %v1507, %v1545
        %v1643 = vadd.f32 %v1508, %v1545
        %v1644 = vadd.f32 %v1509, %v1545
        %v1645 = vadd.f32 %v1510, %v1545
        %v1646 = vadd.f32 %v1511, %v1545
        %v1647 = vadd.f32 %v1512, %v1545
        %v1648 = vadd.f32 %v1513, %v1545
        %v1649 = vadd.f32 %v1514, %v1545
        %v1650 = vadd.f32 %v1515, %v1545
        %v1651 = vadd.f32 %v1516, %v1545
        %v1652 = vadd.f32 %v1517, %v1545
        %v1653 = vadd.f32 %v1518, %v1545
        %v1654 = vadd.f32 %v1519, %v1545
        %v1655 = vadd.f32 %v1520, %v1545
        %v1656 = vadd.f32 %v1521, %v1545
        %v1657 = vadd.f32 %v1522, %v1545
        %v1658 = vadd.f32 %v1523, %v1545
        %v1659 = vadd.f32 %v1524, %v1545
        %v1660 = vadd.f32 %v1525, %v1545
        %v1661 = vadd.f32 %v1526, %v1545
        %v1662 = vadd.f32 %v1527, %v1545
        %v1663 = vadd.f32 %v1528, %v1545
        %v1664 = vadd.f32 %v1529, %v1545
        %v1665 = vadd.f32 %v1530, %v1545
        %v1666 = vadd.f32 %v1531, %v1545
        %v1667 = vadd.f32 %v1532, %v1545
        %v1668 = vadd.f32 %v1533, %v1545
        %v1669 = vadd.f32 %v1534, %v1545
        %v1670 = vadd.f32 %v1535, %v1545
        %v1671 = vadd.f32 %v1536, %v1545
        %v1672 = vadd.f32 %v1537, %v1545
        %v1673 = vadd.f32 %v1538, %v1545
        %v1674 = vadd.f32 %v1539, %v1545
        %v1675 = vmax.f32 %v1547, 0.0
        %v1676 = vmax.f32 %v1548, 0.0
        %v1677 = vmax.f32 %v1549, 0.0
        %v1678 = vmax.f32 %v1550, 0.0
        %v1679 = vmax.f32 %v1551, 0.0
        %v1680 = vmax.f32 %v1552, 0.0
        %v1681 = vmax.f32 %v1553, 0.0
        %v1682 = vmax.f32 %v1554, 0.0
        %v1683 = vmax.f32 %v1555, 0.0
        %v1684 = vmax.f32 %v1556, 0.0
        %v1685 = vmax.f32 %v1557, 0.0
        %v1686 = vmax.f32 %v1558, 0.0
        %v1687 = vmax.f32 %v1559, 0.0
        %v1688 = vmax.f32 %v1560, 0.0
        %v1689 = vmax.f32 %v1561, 0.0
        %v1690 = vmax.f32 %v1562, 0.0
        %v1691 = vmax.f32 %v1563, 0.0
        %v1692 = vmax.f32 %v1564, 0.0
        %v1693 = vmax.f32 %v1565, 0.0
        %v1694 = vmax.f32 %v1566, 0.0
        %v1695 = vmax.f32 %v1567, 0.0
        %v1696 = vmax.f32 %v1568, 0.0
        %v1697 = vmax.f32 %v1569, 0.0
        %v1698 = vmax.f32 %v1570, 0.0
        %v1699 = vmax.f32 %v1571, 0.0
        %v1700 = vmax.f32 %v1572, 0.0
        %v1701 = vmax.f32 %v1573, 0.0
        %v1702 = vmax.f32 %v1574, 0.0
        %v1703 = vmax.f32 %v1575, 0.0
        %v1704 = vmax.f32 %v1576, 0.0
        %v1705 = vmax.f32 %v1577, 0.0
        %v1706 = vmax.f32 %v1578, 0.0
        %v1707 = vmax.f32 %v1579, 0.0
        %v1708 = vmax.f32 %v1580, 0.0
        %v1709 = vmax.f32 %v1581, 0.0
        %v1710 = vmax.f32 %v1582, 0.0
        %v1711 = vmax.f32 %v1583, 0.0
        %v1712 = vmax.f32 %v1584, 0.0
        %v1713 = vmax.f32 %v1585, 0.0
        %v1714 = vmax.f32 %v1586, 0.0
        %v1715 = vmax.f32 %v1587, 0.0
        %v1716 = vmax.f32 %v1588, 0.0
        %v1717 = vmax.f32 %v1589, 0.0
        %v1718 = vmax.f32 %v1590, 0.0
        %v1719 = vmax.f32 %v1591, 0.0
        %v1720 = vmax.f32 %v1592, 0.0
        %v1721 = vmax.f32 %v1593, 0.0
        %v1722 = vmax.f32 %v1594, 0.0
        %v1723 = vmax.f32 %v1595, 0.0
        %v1724 = vmax.f32 %v1596, 0.0
        %v1725 = vmax.f32 %v1597, 0.0
        %v1726 = vmax.f32 %v1598, 0.0
        %v1727 = vmax.f32 %v1599, 0.0
        %v1728 = vmax.f32 %v1600, 0.0
        %v1729 = vmax.f32 %v1601, 0.0
        %v1730 = vmax.f32 %v1602, 0.0
        %v1731 = vmax.f32 %v1603, 0.0
        %v1732 = vmax.f32 %v1604, 0.0
        %v1733 = vmax.f32 %v1605, 0.0
        %v1734 = vmax.f32 %v1606, 0.0
        %v1735 = vmax.f32 %v1607, 0.0
        %v1736 = vmax.f32 %v1608, 0.0
        %v1737 = vmax.f32 %v1609, 0.0
        %v1738 = vmax.f32 %v1610, 0.0
        %v1739 = vmax.f32 %v1611, 0.0
        %v1740 = vmax.f32 %v1612, 0.0
        %v1741 = vmax.f32 %v1613, 0.0
        %v1742 = vmax.f32 %v1614, 0.0
        %v1743 = vmax.f32 %v1615, 0.0
        %v1744 = vmax.f32 %v1616, 0.0
        %v1745 = vmax.f32 %v1617, 0.0
        %v1746 = vmax.f32 %v1618, 0.0
        %v1747 = vmax.f32 %v1619, 0.0
        %v1748 = vmax.f32 %v1620, 0.0
        %v1749 = vmax.f32 %v1621, 0.0
        %v1750 = vmax.f32 %v1622, 0.0
        %v1751 = vmax.f32 %v1623, 0.0
        %v1752 = vmax.f32 %v1624, 0.0
        %v1753 = vmax.f32 %v1625, 0.0
        %v1754 = vmax.f32 %v1626, 0.0
        %v1755 = vmax.f32 %v1627, 0.0
        %v1756 = vmax.f32 %v1628, 0.0
        %v1757 = vmax.f32 %v1629, 0.0
        %v1758 = vmax.f32 %v1630, 0.0
        %v1759 = vmax.f32 %v1631, 0.0
        %v1760 = vmax.f32 %v1632, 0.0
        %v1761 = vmax.f32 %v1633, 0.0
        %v1762 = vmax.f32 %v1634, 0.0
        %v1763 = vmax.f32 %v1635, 0.0
        %v1764 = vmax.f32 %v1636, 0.0
        %v1765 = vmax.f32 %v1637, 0.0
        %v1766 = vmax.f32 %v1638, 0.0
        %v1767 = vmax.f32 %v1639, 0.0
        %v1768 = vmax.f32 %v1640, 0.0
        %v1769 = vmax.f32 %v1641, 0.0
        %v1770 = vmax.f32 %v1642, 0.0
        %v1771 = vmax.f32 %v1643, 0.0
        %v1772 = vmax.f32 %v1644, 0.0
        %v1773 = vmax.f32 %v1645, 0.0
        %v1774 = vmax.f32 %v1646, 0.0
        %v1775 = vmax.f32 %v1647, 0.0
        %v1776 = vmax.f32 %v1648, 0.0
        %v1777 = vmax.f32 %v1649, 0.0
        %v1778 = vmax.f32 %v1650, 0.0
        %v1779 = vmax.f32 %v1651, 0.0
        %v1780 = vmax.f32 %v1652, 0.0
        %v1781 = vmax.f32 %v1653, 0.0
        %v1782 = vmax.f32 %v1654, 0.0
        %v1783 = vmax.f32 %v1655, 0.0
        %v1784 = vmax.f32 %v1656, 0.0
        %v1785 = vmax.f32 %v1657, 0.0
        %v1786 = vmax.f32 %v1658, 0.0
        %v1787 = vmax.f32 %v1659, 0.0
        %v1788 = vmax.f32 %v1660, 0.0
        %v1789 = vmax.f32 %v1661, 0.0
        %v1790 = vmax.f32 %v1662, 0.0
        %v1791 = vmax.f32 %v1663, 0.0
        %v1792 = vmax.f32 %v1664, 0.0
        %v1793 = vmax.f32 %v1665, 0.0
        %v1794 = vmax.f32 %v1666, 0.0
        %v1795 = vmax.f32 %v1667, 0.0
        %v1796 = vmax.f32 %v1668, 0.0
        %v1797 = vmax.f32 %v1669, 0.0
        %v1798 = vmax.f32 %v1670, 0.0
        %v1799 = vmax.f32 %v1671, 0.0
        %v1800 = vmax.f32 %v1672, 0.0
        %v1801 = vmax.f32 %v1673, 0.0
        %v1802 = vmax.f32 %v1674, 0.0
        %v1803 = vpack.c.bf16 %v1676, %v1675
        %v1804 = vpack.c.bf16 %v1678, %v1677
        %v1805 = vpack.c.bf16 %v1680, %v1679
        %v1806 = vpack.c.bf16 %v1682, %v1681
        %v1807 = vpack.c.bf16 %v1684, %v1683
        %v1808 = vpack.c.bf16 %v1686, %v1685
        %v1809 = vpack.c.bf16 %v1688, %v1687
        %v1810 = vpack.c.bf16 %v1690, %v1689
        %v1811 = vpack.c.bf16 %v1692, %v1691
        %v1812 = vpack.c.bf16 %v1694, %v1693
        %v1813 = vpack.c.bf16 %v1696, %v1695
        %v1814 = vpack.c.bf16 %v1698, %v1697
        %v1815 = vpack.c.bf16 %v1700, %v1699
        %v1816 = vpack.c.bf16 %v1702, %v1701
        %v1817 = vpack.c.bf16 %v1704, %v1703
        %v1818 = vpack.c.bf16 %v1706, %v1705
        %v1819 = vpack.c.bf16 %v1708, %v1707
        %v1820 = vpack.c.bf16 %v1710, %v1709
        %v1821 = vpack.c.bf16 %v1712, %v1711
        %v1822 = vpack.c.bf16 %v1714, %v1713
        %v1823 = vpack.c.bf16 %v1716, %v1715
        %v1824 = vpack.c.bf16 %v1718, %v1717
        %v1825 = vpack.c.bf16 %v1720, %v1719
        %v1826 = vpack.c.bf16 %v1722, %v1721
        %v1827 = vpack.c.bf16 %v1724, %v1723
        %v1828 = vpack.c.bf16 %v1726, %v1725
        %v1829 = vpack.c.bf16 %v1728, %v1727
        %v1830 = vpack.c.bf16 %v1730, %v1729
        %v1831 = vpack.c.bf16 %v1732, %v1731
        %v1832 = vpack.c.bf16 %v1734, %v1733
        %v1833 = vpack.c.bf16 %v1736, %v1735
        %v1834 = vpack.c.bf16 %v1738, %v1737
        %v1835 = vpack.c.bf16 %v1740, %v1739
        %v1836 = vpack.c.bf16 %v1742, %v1741
        %v1837 = vpack.c.bf16 %v1744, %v1743
        %v1838 = vpack.c.bf16 %v1746, %v1745
        %v1839 = vpack.c.bf16 %v1748, %v1747
        %v1840 = vpack.c.bf16 %v1750, %v1749
        %v1841 = vpack.c.bf16 %v1752, %v1751
        %v1842 = vpack.c.bf16 %v1754, %v1753
        %v1843 = vpack.c.bf16 %v1756, %v1755
        %v1844 = vpack.c.bf16 %v1758, %v1757
        %v1845 = vpack.c.bf16 %v1760, %v1759
        %v1846 = vpack.c.bf16 %v1762, %v1761
        %v1847 = vpack.c.bf16 %v1764, %v1763
        %v1848 = vpack.c.bf16 %v1766, %v1765
        %v1849 = vpack.c.bf16 %v1768, %v1767
        %v1850 = vpack.c.bf16 %v1770, %v1769
        %v1851 = vpack.c.bf16 %v1772, %v1771
        %v1852 = vpack.c.bf16 %v1774, %v1773
        %v1853 = vpack.c.bf16 %v1776, %v1775
        %v1854 = vpack.c.bf16 %v1778, %v1777
        %v1855 = vpack.c.bf16 %v1780, %v1779
        %v1856 = vpack.c.bf16 %v1782, %v1781
        %v1857 = vpack.c.bf16 %v1784, %v1783
        %v1858 = vpack.c.bf16 %v1786, %v1785
        %v1859 = vpack.c.bf16 %v1788, %v1787
        %v1860 = vpack.c.bf16 %v1790, %v1789
        %v1861 = vpack.c.bf16 %v1792, %v1791
        %v1862 = vpack.c.bf16 %v1794, %v1793
        %v1863 = vpack.c.bf16 %v1796, %v1795
        %v1864 = vpack.c.bf16 %v1798, %v1797
        %v1865 = vpack.c.bf16 %v1800, %v1799
        %v1866 = vpack.c.bf16 %v1802, %v1801
        %v1931 = vunpack.c.l.b16 %v1803
        %v1932 = vunpack.c.h.b16 %v1803
        %v1933 = vunpack.c.l.b16 %v1804
        %v1934 = vunpack.c.h.b16 %v1804
        %v1935 = vunpack.c.l.b16 %v1805
        %v1936 = vunpack.c.h.b16 %v1805
        %v1937 = vunpack.c.l.b16 %v1806
        %v1938 = vunpack.c.h.b16 %v1806
        %v1939 = vunpack.c.l.b16 %v1807
        %v1940 = vunpack.c.h.b16 %v1807
        %v1941 = vunpack.c.l.b16 %v1808
        %v1942 = vunpack.c.h.b16 %v1808
        %v1943 = vunpack.c.l.b16 %v1809
        %v1944 = vunpack.c.h.b16 %v1809
        %v1945 = vunpack.c.l.b16 %v1810
        %v1946 = vunpack.c.h.b16 %v1810
        %v1947 = vunpack.c.l.b16 %v1811
        %v1948 = vunpack.c.h.b16 %v1811
        %v1949 = vunpack.c.l.b16 %v1812
        %v1950 = vunpack.c.h.b16 %v1812
        %v1951 = vunpack.c.l.b16 %v1813
        %v1952 = vunpack.c.h.b16 %v1813
        %v1953 = vunpack.c.l.b16 %v1814
        %v1954 = vunpack.c.h.b16 %v1814
        %v1955 = vunpack.c.l.b16 %v1815
        %v1956 = vunpack.c.h.b16 %v1815
        %v1957 = vunpack.c.l.b16 %v1816
        %v1958 = vunpack.c.h.b16 %v1816
        %v1959 = vunpack.c.l.b16 %v1817
        %v1960 = vunpack.c.h.b16 %v1817
        %v1961 = vunpack.c.l.b16 %v1818
        %v1962 = vunpack.c.h.b16 %v1818
        %v1963 = vunpack.c.l.b16 %v1819
        %v1964 = vunpack.c.h.b16 %v1819
        %v1965 = vunpack.c.l.b16 %v1820
        %v1966 = vunpack.c.h.b16 %v1820
        %v1967 = vunpack.c.l.b16 %v1821
        %v1968 = vunpack.c.h.b16 %v1821
        %v1969 = vunpack.c.l.b16 %v1822
        %v1970 = vunpack.c.h.b16 %v1822
        %v1971 = vunpack.c.l.b16 %v1823
        %v1972 = vunpack.c.h.b16 %v1823
        %v1973 = vunpack.c.l.b16 %v1824
        %v1974 = vunpack.c.h.b16 %v1824
        %v1975 = vunpack.c.l.b16 %v1825
        %v1976 = vunpack.c.h.b16 %v1825
        %v1977 = vunpack.c.l.b16 %v1826
        %v1978 = vunpack.c.h.b16 %v1826
        %v1979 = vunpack.c.l.b16 %v1827
        %v1980 = vunpack.c.h.b16 %v1827
        %v1981 = vunpack.c.l.b16 %v1828
        %v1982 = vunpack.c.h.b16 %v1828
        %v1983 = vunpack.c.l.b16 %v1829
        %v1984 = vunpack.c.h.b16 %v1829
        %v1985 = vunpack.c.l.b16 %v1830
        %v1986 = vunpack.c.h.b16 %v1830
        %v1987 = vunpack.c.l.b16 %v1831
        %v1988 = vunpack.c.h.b16 %v1831
        %v1989 = vunpack.c.l.b16 %v1832
        %v1990 = vunpack.c.h.b16 %v1832
        %v1991 = vunpack.c.l.b16 %v1833
        %v1992 = vunpack.c.h.b16 %v1833
        %v1993 = vunpack.c.l.b16 %v1834
        %v1994 = vunpack.c.h.b16 %v1834
        %v1995 = vunpack.c.l.b16 %v1835
        %v1996 = vunpack.c.h.b16 %v1835
        %v1997 = vunpack.c.l.b16 %v1836
        %v1998 = vunpack.c.h.b16 %v1836
        %v1999 = vunpack.c.l.b16 %v1837
        %v2000 = vunpack.c.h.b16 %v1837
        %v2001 = vunpack.c.l.b16 %v1838
        %v2002 = vunpack.c.h.b16 %v1838
        %v2003 = vunpack.c.l.b16 %v1839
        %v2004 = vunpack.c.h.b16 %v1839
        %v2005 = vunpack.c.l.b16 %v1840
        %v2006 = vunpack.c.h.b16 %v1840
        %v2007 = vunpack.c.l.b16 %v1841
        %v2008 = vunpack.c.h.b16 %v1841
        %v2009 = vunpack.c.l.b16 %v1842
        %v2010 = vunpack.c.h.b16 %v1842
        %v2011 = vunpack.c.l.b16 %v1843
        %v2012 = vunpack.c.h.b16 %v1843
        %v2013 = vunpack.c.l.b16 %v1844
        %v2014 = vunpack.c.h.b16 %v1844
        %v2015 = vunpack.c.l.b16 %v1845
        %v2016 = vunpack.c.h.b16 %v1845
        %v2017 = vunpack.c.l.b16 %v1846
        %v2018 = vunpack.c.h.b16 %v1846
        %v2019 = vunpack.c.l.b16 %v1847
        %v2020 = vunpack.c.h.b16 %v1847
        %v2021 = vunpack.c.l.b16 %v1848
        %v2022 = vunpack.c.h.b16 %v1848
        %v2023 = vunpack.c.l.b16 %v1849
        %v2024 = vunpack.c.h.b16 %v1849
        %v2025 = vunpack.c.l.b16 %v1850
        %v2026 = vunpack.c.h.b16 %v1850
        %v2027 = vunpack.c.l.b16 %v1851
        %v2028 = vunpack.c.h.b16 %v1851
        %v2029 = vunpack.c.l.b16 %v1852
        %v2030 = vunpack.c.h.b16 %v1852
        %v2031 = vunpack.c.l.b16 %v1853
        %v2032 = vunpack.c.h.b16 %v1853
        %v2033 = vunpack.c.l.b16 %v1854
        %v2034 = vunpack.c.h.b16 %v1854
        %v2035 = vunpack.c.l.b16 %v1855
        %v2036 = vunpack.c.h.b16 %v1855
        %v2037 = vunpack.c.l.b16 %v1856
        %v2038 = vunpack.c.h.b16 %v1856
        %v2039 = vunpack.c.l.b16 %v1857
        %v2040 = vunpack.c.h.b16 %v1857
        %v2041 = vunpack.c.l.b16 %v1858
        %v2042 = vunpack.c.h.b16 %v1858
        %v2043 = vunpack.c.l.b16 %v1859
        %v2044 = vunpack.c.h.b16 %v1859
        %v2045 = vunpack.c.l.b16 %v1860
        %v2046 = vunpack.c.h.b16 %v1860
        %v2047 = vunpack.c.l.b16 %v1861
        %v2048 = vunpack.c.h.b16 %v1861
        %v2049 = vunpack.c.l.b16 %v1862
        %v2050 = vunpack.c.h.b16 %v1862
        %v2051 = vunpack.c.l.b16 %v1863
        %v2052 = vunpack.c.h.b16 %v1863
        %v2053 = vunpack.c.l.b16 %v1864
        %v2054 = vunpack.c.h.b16 %v1864
        %v2055 = vunpack.c.l.b16 %v1865
        %v2056 = vunpack.c.h.b16 %v1865
        %v2057 = vunpack.c.l.b16 %v1866
        %v2058 = vunpack.c.h.b16 %v1866
        %v2059 = vpack.c.b16 %v1931, %v1931
        %v2060 = vpack.c.b16 %v1932, %v1932
        %v2061 = vpack.c.b16 %v1933, %v1933
        %v2062 = vpack.c.b16 %v1934, %v1934
        %v2063 = vpack.c.b16 %v1935, %v1935
        %v2064 = vpack.c.b16 %v1936, %v1936
        %v2065 = vpack.c.b16 %v1937, %v1937
        %v2066 = vpack.c.b16 %v1938, %v1938
        %v2067 = vpack.c.b16 %v1939, %v1939
        %v2068 = vpack.c.b16 %v1940, %v1940
        %v2069 = vpack.c.b16 %v1941, %v1941
        %v2070 = vpack.c.b16 %v1942, %v1942
        %v2071 = vpack.c.b16 %v1943, %v1943
        %v2072 = vpack.c.b16 %v1944, %v1944
        %v2073 = vpack.c.b16 %v1945, %v1945
        %v2074 = vpack.c.b16 %v1946, %v1946
        %v2075 = vpack.c.b16 %v1947, %v1947
        %v2076 = vpack.c.b16 %v1948, %v1948
        %v2077 = vpack.c.b16 %v1949, %v1949
        %v2078 = vpack.c.b16 %v1950, %v1950
        %v2079 = vpack.c.b16 %v1951, %v1951
        %v2080 = vpack.c.b16 %v1952, %v1952
        %v2081 = vpack.c.b16 %v1953, %v1953
        %v2082 = vpack.c.b16 %v1954, %v1954
        %v2083 = vpack.c.b16 %v1955, %v1955
        %v2084 = vpack.c.b16 %v1956, %v1956
        %v2085 = vpack.c.b16 %v1957, %v1957
        %v2086 = vpack.c.b16 %v1958, %v1958
        %v2087 = vpack.c.b16 %v1959, %v1959
        %v2088 = vpack.c.b16 %v1960, %v1960
        %v2089 = vpack.c.b16 %v1961, %v1961
        %v2090 = vpack.c.b16 %v1962, %v1962
        %v2091 = vpack.c.b16 %v1963, %v1963
        %v2092 = vpack.c.b16 %v1964, %v1964
        %v2093 = vpack.c.b16 %v1965, %v1965
        %v2094 = vpack.c.b16 %v1966, %v1966
        %v2095 = vpack.c.b16 %v1967, %v1967
        %v2096 = vpack.c.b16 %v1968, %v1968
        %v2097 = vpack.c.b16 %v1969, %v1969
        %v2098 = vpack.c.b16 %v1970, %v1970
        %v2099 = vpack.c.b16 %v1971, %v1971
        %v2100 = vpack.c.b16 %v1972, %v1972
        %v2101 = vpack.c.b16 %v1973, %v1973
        %v2102 = vpack.c.b16 %v1974, %v1974
        %v2103 = vpack.c.b16 %v1975, %v1975
        %v2104 = vpack.c.b16 %v1976, %v1976
        %v2105 = vpack.c.b16 %v1977, %v1977
        %v2106 = vpack.c.b16 %v1978, %v1978
        %v2107 = vpack.c.b16 %v1979, %v1979
        %v2108 = vpack.c.b16 %v1980, %v1980
        %v2109 = vpack.c.b16 %v1981, %v1981
        %v2110 = vpack.c.b16 %v1982, %v1982
        %v2111 = vpack.c.b16 %v1983, %v1983
        %v2112 = vpack.c.b16 %v1984, %v1984
        %v2113 = vpack.c.b16 %v1985, %v1985
        %v2114 = vpack.c.b16 %v1986, %v1986
        %v2115 = vpack.c.b16 %v1987, %v1987
        %v2116 = vpack.c.b16 %v1988, %v1988
        %v2117 = vpack.c.b16 %v1989, %v1989
        %v2118 = vpack.c.b16 %v1990, %v1990
        %v2119 = vpack.c.b16 %v1991, %v1991
        %v2120 = vpack.c.b16 %v1992, %v1992
        %v2121 = vpack.c.b16 %v1993, %v1993
        %v2122 = vpack.c.b16 %v1994, %v1994
        %v2123 = vpack.c.b16 %v1995, %v1995
        %v2124 = vpack.c.b16 %v1996, %v1996
        %v2125 = vpack.c.b16 %v1997, %v1997
        %v2126 = vpack.c.b16 %v1998, %v1998
        %v2127 = vpack.c.b16 %v1999, %v1999
        %v2128 = vpack.c.b16 %v2000, %v2000
        %v2129 = vpack.c.b16 %v2001, %v2001
        %v2130 = vpack.c.b16 %v2002, %v2002
        %v2131 = vpack.c.b16 %v2003, %v2003
        %v2132 = vpack.c.b16 %v2004, %v2004
        %v2133 = vpack.c.b16 %v2005, %v2005
        %v2134 = vpack.c.b16 %v2006, %v2006
        %v2135 = vpack.c.b16 %v2007, %v2007
        %v2136 = vpack.c.b16 %v2008, %v2008
        %v2137 = vpack.c.b16 %v2009, %v2009
        %v2138 = vpack.c.b16 %v2010, %v2010
        %v2139 = vpack.c.b16 %v2011, %v2011
        %v2140 = vpack.c.b16 %v2012, %v2012
        %v2141 = vpack.c.b16 %v2013, %v2013
        %v2142 = vpack.c.b16 %v2014, %v2014
        %v2143 = vpack.c.b16 %v2015, %v2015
        %v2144 = vpack.c.b16 %v2016, %v2016
        %v2145 = vpack.c.b16 %v2017, %v2017
        %v2146 = vpack.c.b16 %v2018, %v2018
        %v2147 = vpack.c.b16 %v2019, %v2019
        %v2148 = vpack.c.b16 %v2020, %v2020
        %v2149 = vpack.c.b16 %v2021, %v2021
        %v2150 = vpack.c.b16 %v2022, %v2022
        %v2151 = vpack.c.b16 %v2023, %v2023
        %v2152 = vpack.c.b16 %v2024, %v2024
        %v2153 = vpack.c.b16 %v2025, %v2025
        %v2154 = vpack.c.b16 %v2026, %v2026
        %v2155 = vpack.c.b16 %v2027, %v2027
        %v2156 = vpack.c.b16 %v2028, %v2028
        %v2157 = vpack.c.b16 %v2029, %v2029
        %v2158 = vpack.c.b16 %v2030, %v2030
        %v2159 = vpack.c.b16 %v2031, %v2031
        %v2160 = vpack.c.b16 %v2032, %v2032
        %v2161 = vpack.c.b16 %v2033, %v2033
        %v2162 = vpack.c.b16 %v2034, %v2034
        %v2163 = vpack.c.b16 %v2035, %v2035
        %v2164 = vpack.c.b16 %v2036, %v2036
        %v2165 = vpack.c.b16 %v2037, %v2037
        %v2166 = vpack.c.b16 %v2038, %v2038
        %v2167 = vpack.c.b16 %v2039, %v2039
        %v2168 = vpack.c.b16 %v2040, %v2040
        %v2169 = vpack.c.b16 %v2041, %v2041
        %v2170 = vpack.c.b16 %v2042, %v2042
        %v2171 = vpack.c.b16 %v2043, %v2043
        %v2172 = vpack.c.b16 %v2044, %v2044
        %v2173 = vpack.c.b16 %v2045, %v2045
        %v2174 = vpack.c.b16 %v2046, %v2046
        %v2175 = vpack.c.b16 %v2047, %v2047
        %v2176 = vpack.c.b16 %v2048, %v2048
        %v2177 = vpack.c.b16 %v2049, %v2049
        %v2178 = vpack.c.b16 %v2050, %v2050
        %v2179 = vpack.c.b16 %v2051, %v2051
        %v2180 = vpack.c.b16 %v2052, %v2052
        %v2181 = vpack.c.b16 %v2053, %v2053
        %v2182 = vpack.c.b16 %v2054, %v2054
        %v2183 = vpack.c.b16 %v2055, %v2055
        %v2184 = vpack.c.b16 %v2056, %v2056
        %v2185 = vpack.c.b16 %v2057, %v2057
        %v2186 = vpack.c.b16 %v2058, %v2058
        %vm2315 = vcmask 519168
        %2316 = vst.msk [vmem:[%s190] sm:$0xf] %vm2315, %v2059
        %2317 = vst.msk [vmem:[%s190 + $0x4] sm:$0xf] %vm2315, %v2060
        %2318 = vst.msk [vmem:[%s190 + $0x8] sm:$0xf] %vm2315, %v2061
        %2319 = vst.msk [vmem:[%s190 + $0xc] sm:$0xf] %vm2315, %v2062
        %2320 = vst.msk [vmem:[%s190 + $0x10] sm:$0xf] %vm2315, %v2063
        %2321 = vst.msk [vmem:[%s190 + $0x14] sm:$0xf] %vm2315, %v2064
        %2322 = vst.msk [vmem:[%s190 + $0x18] sm:$0xf] %vm2315, %v2065
        %2323 = vst.msk [vmem:[%s190 + $0x1c] sm:$0xf] %vm2315, %v2066
        %2324 = vst.msk [vmem:[%s190 + $0x20] sm:$0xf] %vm2315, %v2067
        %2325 = vst.msk [vmem:[%s190 + $0x24] sm:$0xf] %vm2315, %v2068
        %2326 = vst.msk [vmem:[%s190 + $0x28] sm:$0xf] %vm2315, %v2069
        %2327 = vst.msk [vmem:[%s190 + $0x2c] sm:$0xf] %vm2315, %v2070
        %2328 = vst.msk [vmem:[%s190 + $0x30] sm:$0xf] %vm2315, %v2071
        %2329 = vst.msk [vmem:[%s190 + $0x34] sm:$0xf] %vm2315, %v2072
        %2330 = vst.msk [vmem:[%s190 + $0x38] sm:$0xf] %vm2315, %v2073
        %2331 = vst.msk [vmem:[%s190 + $0x3c] sm:$0xf] %vm2315, %v2074
        %2332 = vst.msk [vmem:[%s190 + $0x40] sm:$0xf] %vm2315, %v2075
        %2333 = vst.msk [vmem:[%s190 + $0x44] sm:$0xf] %vm2315, %v2076
        %2334 = vst.msk [vmem:[%s190 + $0x48] sm:$0xf] %vm2315, %v2077
        %2335 = vst.msk [vmem:[%s190 + $0x4c] sm:$0xf] %vm2315, %v2078
        %2336 = vst.msk [vmem:[%s190 + $0x50] sm:$0xf] %vm2315, %v2079
        %2337 = vst.msk [vmem:[%s190 + $0x54] sm:$0xf] %vm2315, %v2080
        %2338 = vst.msk [vmem:[%s190 + $0x58] sm:$0xf] %vm2315, %v2081
        %2339 = vst.msk [vmem:[%s190 + $0x5c] sm:$0xf] %vm2315, %v2082
        %2340 = vst.msk [vmem:[%s190 + $0x60] sm:$0xf] %vm2315, %v2083
        %2341 = vst.msk [vmem:[%s190 + $0x64] sm:$0xf] %vm2315, %v2084
        %2342 = vst.msk [vmem:[%s190 + $0x68] sm:$0xf] %vm2315, %v2085
        %2343 = vst.msk [vmem:[%s190 + $0x6c] sm:$0xf] %vm2315, %v2086
        %2344 = vst.msk [vmem:[%s190 + $0x70] sm:$0xf] %vm2315, %v2087
        %2345 = vst.msk [vmem:[%s190 + $0x74] sm:$0xf] %vm2315, %v2088
        %2346 = vst.msk [vmem:[%s190 + $0x78] sm:$0xf] %vm2315, %v2089
        %2347 = vst.msk [vmem:[%s190 + $0x7c] sm:$0xf] %vm2315, %v2090
        %2348 = vst.msk [vmem:[%s190 + $0x80] sm:$0xf] %vm2315, %v2091
        %2349 = vst.msk [vmem:[%s190 + $0x84] sm:$0xf] %vm2315, %v2092
        %2350 = vst.msk [vmem:[%s190 + $0x88] sm:$0xf] %vm2315, %v2093
        %2351 = vst.msk [vmem:[%s190 + $0x8c] sm:$0xf] %vm2315, %v2094
        %2352 = vst.msk [vmem:[%s190 + $0x90] sm:$0xf] %vm2315, %v2095
        %2353 = vst.msk [vmem:[%s190 + $0x94] sm:$0xf] %vm2315, %v2096
        %2354 = vst.msk [vmem:[%s190 + $0x98] sm:$0xf] %vm2315, %v2097
        %2355 = vst.msk [vmem:[%s190 + $0x9c] sm:$0xf] %vm2315, %v2098
        %2356 = vst.msk [vmem:[%s190 + $0xa0] sm:$0xf] %vm2315, %v2099
        %2357 = vst.msk [vmem:[%s190 + $0xa4] sm:$0xf] %vm2315, %v2100
        %2358 = vst.msk [vmem:[%s190 + $0xa8] sm:$0xf] %vm2315, %v2101
        %2359 = vst.msk [vmem:[%s190 + $0xac] sm:$0xf] %vm2315, %v2102
        %2360 = vst.msk [vmem:[%s190 + $0xb0] sm:$0xf] %vm2315, %v2103
        %2361 = vst.msk [vmem:[%s190 + $0xb4] sm:$0xf] %vm2315, %v2104
        %2362 = vst.msk [vmem:[%s190 + $0xb8] sm:$0xf] %vm2315, %v2105
        %2363 = vst.msk [vmem:[%s190 + $0xbc] sm:$0xf] %vm2315, %v2106
        %2364 = vst.msk [vmem:[%s190 + $0xc0] sm:$0xf] %vm2315, %v2107
        %2365 = vst.msk [vmem:[%s190 + $0xc4] sm:$0xf] %vm2315, %v2108
        %2366 = vst.msk [vmem:[%s190 + $0xc8] sm:$0xf] %vm2315, %v2109
        %2367 = vst.msk [vmem:[%s190 + $0xcc] sm:$0xf] %vm2315, %v2110
        %2368 = vst.msk [vmem:[%s190 + $0xd0] sm:$0xf] %vm2315, %v2111
        %2369 = vst.msk [vmem:[%s190 + $0xd4] sm:$0xf] %vm2315, %v2112
        %2370 = vst.msk [vmem:[%s190 + $0xd8] sm:$0xf] %vm2315, %v2113
        %2371 = vst.msk [vmem:[%s190 + $0xdc] sm:$0xf] %vm2315, %v2114
        %2372 = vst.msk [vmem:[%s190 + $0xe0] sm:$0xf] %vm2315, %v2115
        %2373 = vst.msk [vmem:[%s190 + $0xe4] sm:$0xf] %vm2315, %v2116
        %2374 = vst.msk [vmem:[%s190 + $0xe8] sm:$0xf] %vm2315, %v2117
        %2375 = vst.msk [vmem:[%s190 + $0xec] sm:$0xf] %vm2315, %v2118
        %2376 = vst.msk [vmem:[%s190 + $0xf0] sm:$0xf] %vm2315, %v2119
        %2377 = vst.msk [vmem:[%s190 + $0xf4] sm:$0xf] %vm2315, %v2120
        %2378 = vst.msk [vmem:[%s190 + $0xf8] sm:$0xf] %vm2315, %v2121
        %2379 = vst.msk [vmem:[%s190 + $0xfc] sm:$0xf] %vm2315, %v2122
        %2380 = vst.msk [vmem:[%s190 + $0x100] sm:$0xf] %vm2315, %v2123
        %2381 = vst.msk [vmem:[%s190 + $0x104] sm:$0xf] %vm2315, %v2124
        %2382 = vst.msk [vmem:[%s190 + $0x108] sm:$0xf] %vm2315, %v2125
        %2383 = vst.msk [vmem:[%s190 + $0x10c] sm:$0xf] %vm2315, %v2126
        %2384 = vst.msk [vmem:[%s190 + $0x110] sm:$0xf] %vm2315, %v2127
        %2385 = vst.msk [vmem:[%s190 + $0x114] sm:$0xf] %vm2315, %v2128
        %2386 = vst.msk [vmem:[%s190 + $0x118] sm:$0xf] %vm2315, %v2129
        %2387 = vst.msk [vmem:[%s190 + $0x11c] sm:$0xf] %vm2315, %v2130
        %2388 = vst.msk [vmem:[%s190 + $0x120] sm:$0xf] %vm2315, %v2131
        %2389 = vst.msk [vmem:[%s190 + $0x124] sm:$0xf] %vm2315, %v2132
        %2390 = vst.msk [vmem:[%s190 + $0x128] sm:$0xf] %vm2315, %v2133
        %2391 = vst.msk [vmem:[%s190 + $0x12c] sm:$0xf] %vm2315, %v2134
        %2392 = vst.msk [vmem:[%s190 + $0x130] sm:$0xf] %vm2315, %v2135
        %2393 = vst.msk [vmem:[%s190 + $0x134] sm:$0xf] %vm2315, %v2136
        %2394 = vst.msk [vmem:[%s190 + $0x138] sm:$0xf] %vm2315, %v2137
        %2395 = vst.msk [vmem:[%s190 + $0x13c] sm:$0xf] %vm2315, %v2138
        %2396 = vst.msk [vmem:[%s190 + $0x140] sm:$0xf] %vm2315, %v2139
        %2397 = vst.msk [vmem:[%s190 + $0x144] sm:$0xf] %vm2315, %v2140
        %2398 = vst.msk [vmem:[%s190 + $0x148] sm:$0xf] %vm2315, %v2141
        %2399 = vst.msk [vmem:[%s190 + $0x14c] sm:$0xf] %vm2315, %v2142
        %2400 = vst.msk [vmem:[%s190 + $0x150] sm:$0xf] %vm2315, %v2143
        %2401 = vst.msk [vmem:[%s190 + $0x154] sm:$0xf] %vm2315, %v2144
        %2402 = vst.msk [vmem:[%s190 + $0x158] sm:$0xf] %vm2315, %v2145
        %2403 = vst.msk [vmem:[%s190 + $0x15c] sm:$0xf] %vm2315, %v2146
        %2404 = vst.msk [vmem:[%s190 + $0x160] sm:$0xf] %vm2315, %v2147
        %2405 = vst.msk [vmem:[%s190 + $0x164] sm:$0xf] %vm2315, %v2148
        %2406 = vst.msk [vmem:[%s190 + $0x168] sm:$0xf] %vm2315, %v2149
        %2407 = vst.msk [vmem:[%s190 + $0x16c] sm:$0xf] %vm2315, %v2150
        %2408 = vst.msk [vmem:[%s190 + $0x170] sm:$0xf] %vm2315, %v2151
        %2409 = vst.msk [vmem:[%s190 + $0x174] sm:$0xf] %vm2315, %v2152
        %2410 = vst.msk [vmem:[%s190 + $0x178] sm:$0xf] %vm2315, %v2153
        %2411 = vst.msk [vmem:[%s190 + $0x17c] sm:$0xf] %vm2315, %v2154
        %2412 = vst.msk [vmem:[%s190 + $0x180] sm:$0xf] %vm2315, %v2155
        %2413 = vst.msk [vmem:[%s190 + $0x184] sm:$0xf] %vm2315, %v2156
        %2414 = vst.msk [vmem:[%s190 + $0x188] sm:$0xf] %vm2315, %v2157
        %2415 = vst.msk [vmem:[%s190 + $0x18c] sm:$0xf] %vm2315, %v2158
        %2416 = vst.msk [vmem:[%s190 + $0x190] sm:$0xf] %vm2315, %v2159
        %2417 = vst.msk [vmem:[%s190 + $0x194] sm:$0xf] %vm2315, %v2160
        %2418 = vst.msk [vmem:[%s190 + $0x198] sm:$0xf] %vm2315, %v2161
        %2419 = vst.msk [vmem:[%s190 + $0x19c] sm:$0xf] %vm2315, %v2162
        %2420 = vst.msk [vmem:[%s190 + $0x1a0] sm:$0xf] %vm2315, %v2163
        %2421 = vst.msk [vmem:[%s190 + $0x1a4] sm:$0xf] %vm2315, %v2164
        %2422 = vst.msk [vmem:[%s190 + $0x1a8] sm:$0xf] %vm2315, %v2165
        %2423 = vst.msk [vmem:[%s190 + $0x1ac] sm:$0xf] %vm2315, %v2166
        %2424 = vst.msk [vmem:[%s190 + $0x1b0] sm:$0xf] %vm2315, %v2167
        %2425 = vst.msk [vmem:[%s190 + $0x1b4] sm:$0xf] %vm2315, %v2168
        %2426 = vst.msk [vmem:[%s190 + $0x1b8] sm:$0xf] %vm2315, %v2169
        %2427 = vst.msk [vmem:[%s190 + $0x1bc] sm:$0xf] %vm2315, %v2170
        %2428 = vst.msk [vmem:[%s190 + $0x1c0] sm:$0xf] %vm2315, %v2171
        %2429 = vst.msk [vmem:[%s190 + $0x1c4] sm:$0xf] %vm2315, %v2172
        %2430 = vst.msk [vmem:[%s190 + $0x1c8] sm:$0xf] %vm2315, %v2173
        %2431 = vst.msk [vmem:[%s190 + $0x1cc] sm:$0xf] %vm2315, %v2174
        %2432 = vst.msk [vmem:[%s190 + $0x1d0] sm:$0xf] %vm2315, %v2175
        %2433 = vst.msk [vmem:[%s190 + $0x1d4] sm:$0xf] %vm2315, %v2176
        %2434 = vst.msk [vmem:[%s190 + $0x1d8] sm:$0xf] %vm2315, %v2177
        %2435 = vst.msk [vmem:[%s190 + $0x1dc] sm:$0xf] %vm2315, %v2178
        %2436 = vst.msk [vmem:[%s190 + $0x1e0] sm:$0xf] %vm2315, %v2179
        %2437 = vst.msk [vmem:[%s190 + $0x1e4] sm:$0xf] %vm2315, %v2180
        %2438 = vst.msk [vmem:[%s190 + $0x1e8] sm:$0xf] %vm2315, %v2181
        %2439 = vst.msk [vmem:[%s190 + $0x1ec] sm:$0xf] %vm2315, %v2182
        %2440 = vst.msk [vmem:[%s190 + $0x1f0] sm:$0xf] %vm2315, %v2183
        %2441 = vst.msk [vmem:[%s190 + $0x1f4] sm:$0xf] %vm2315, %v2184
        %2442 = vst.msk [vmem:[%s190 + $0x1f8] sm:$0xf] %vm2315, %v2185
        %2443 = vst.msk [vmem:[%s190 + $0x1fc] sm:$0xf] %vm2315, %v2186
        %s2444 = sand.u32 %s115, 1
        %s2445 = scalar_lea.sflag [#allocation3], %s2444
        %s2446 = sand.u32 %s115, 1
        %s2447 = smul.addr %s2446, 512
        %s2448 = scalar_lea.vmem [#allocation2], %s2447
        // Predicated region
        $region37: #{tpu_custom_call.1} parent=35 // pred_check
          %p2449 = pneg %p125
        $region38: #{tpu_custom_call.1} parent=35 // pred_check_branch
          %2451 = sbr.rel (%p2449) target = $region40
        $region39: #{tpu_custom_call.1} parent=35 // pred_region
          %s2453 = ssub.s32 8192, 8192
          %2454 = vsyncadd %s2445, %s2453
          %s2455 = smul.addr %s18, 128
          %s2456 = smul.addr %s2455, 64
          %s2457 = scalar_lea.hbm %s4, %s2456
          %s2458 = sshll.u32 %s2448, 4
          %s2459 = int_to_ptr.vmem [resolvable:$true] %s2458
          %2464 = dma.vmem_to_hbm [thread:$0]  %s2459, 8192, %s2457, %s2445, 64, 64, 4
        $region40: #{tpu_custom_call.1} parent=35 // pred_fallthru
          _
      $region36: #{tpu_custom_call.1} parent=5 // pred_fallthru
        _
      %p2465 = scmp.le.s32.totalorder 2, %s13
      // Predicated region
      $region41: #{tpu_custom_call.1} parent=5 // pred_check
        %p2466 = pneg %p2465
      $region42: #{tpu_custom_call.1} parent=5 // pred_check_branch
        %2468 = sbr.rel (%p2466) target = $region44
      $region43: #{tpu_custom_call.1} parent=5 // pred_region
        %s2469 = ssub.s32 %s13, 2
        // Predicated region
        $region45: #{tpu_custom_call.1} parent=43 // pred_check
          %p2470 = pneg %p131
        $region46: #{tpu_custom_call.1} parent=43 // pred_check_branch
          %2472 = sbr.rel (%p2470) target = $region48
        $region47: #{tpu_custom_call.1} parent=43 // pred_region
          %s2473 = sand.u32 %s116, 1
          %s2474 = scalar_lea.sflag [#allocation3], %s2473
          %s2475 = sand.u32 %s116, 1
          %s2476 = smul.addr %s2475, 512
          %s2477 = scalar_lea.vmem [#allocation2], %s2476
          %2478 = dma.done %s2474, 8192
        $region48: #{tpu_custom_call.1} parent=43 // pred_fallthru
          _
      $region44: #{tpu_custom_call.1} parent=5 // pred_fallthru
        _
    $region6: #{tpu_custom_call.1} parent=1 // loop_footer
      %s17 = sadd.s32 1, %s13
    $region7: #{tpu_custom_call.1} parent=1 // loop_footer_branch
      %12 = sbr.rel target = $region3
    $region8: #{tpu_custom_call.1} parent=1 // loop_exit
      _
    %2479 = vsyncpa [#allocation3], 1
    %s2480 = scalar_lea.sflag [#allocation3], 1
    %2481 = vsyncpa %s2480, 1

</llo_original>
